<compile_context>
chip_gen: v7x
topology: tpu7x:2x2x1
jax: 0.10.0
libtpu: 0.0.40
codegen_flags: <defaults>
</compile_context>

<pallas_src>
import math

import jax
import jax.numpy as jnp
from jax.experimental import pallas as pl
from jax.experimental.pallas import tpu as pltpu


def _round_up(n, m):
    return ((n + m - 1) // m) * m


def _num_tensorcores():
    """Best-effort TensorCores-per-chip (2 on v7x, else 1)."""
    try:
        kind = (getattr(jax.devices()[0], "device_kind", "") or "").lower()
        if "v7" in kind:
            return 2
    except Exception:
        pass
    return 1


def _make_mlp_kernel(num_hidden):
    """Kernel body for a fixed (static) number of hidden layers.

    In-kernel layout: features on sublanes, batch on the 128 lanes.
      x     : (d_in_pad, TB)            bf16  streamed per grid step
      w_in  : (H, d_in_pad)             bf16  VMEM-resident
      w_hid : (L, H, H)                 bf16  VMEM-resident (omitted if L == 0)
      w_out : (d_out_pad, H)            bf16  VMEM-resident
      b_all : (max(H,d_out_pad), L+2)   f32   VMEM-resident packed biases
      out   : (d_out_pad, TB)           f32   lane-dense, unmasked stores
    """

    def kernel(*refs):
        if num_hidden > 0:
            x_ref, w_in_ref, w_hid_ref, w_out_ref, b_ref, out_ref = refs
        else:
            x_ref, w_in_ref, w_out_ref, b_ref, out_ref = refs
            w_hid_ref = None

        H = w_in_ref.shape[0]
        d_out_p = out_ref.shape[0]
        b_all = b_ref[...]  # tiny resident slab, load once

        # --- input layer: Linear(input_dim, H) + ReLU (small but aligned K) ---
        h = jnp.dot(w_in_ref[...], x_ref[...],
                    preferred_element_type=jnp.float32)
        h = jnp.maximum(h + b_all[:H, 0:1], 0.0)

        # --- hidden layers: Linear(H, H) + ReLU (the real MXU work) ---
        # Static unroll over L (neutral at small L; weights come from one stacked Ref).
        for k in range(num_hidden):
            w = w_hid_ref[k]
            h = jnp.dot(w, h.astype(w.dtype),
                        preferred_element_type=jnp.float32)
            h = jnp.maximum(h + b_all[:H, k + 1:k + 2], 0.0)

        # --- output layer: Linear(H, output_dim), no activation (Q-values) ---
        y = jnp.dot(w_out_ref[...], h.astype(w_out_ref.dtype),
                    preferred_element_type=jnp.float32)
        y = y + b_all[:d_out_p, num_hidden + 1:num_hidden + 2]
        out_ref[...] = y.astype(out_ref.dtype)

    return kernel


def deep_q_net_forward(x, params, *, batch_tile=None, max_batch_tile=1024):
    """x: (B, input_dim) f32  ->  (B, output_dim) f32."""
    B, d_in = x.shape
    H = params["w_in"].shape[0]
    d_out = params["w_out"].shape[0]
    L = len(params["w_hidden"])
    cdt = params["w_in"].dtype  # MXU operand dtype (bf16)

    # ---- adaptive batch tiling (batch on the 128-lane axis) -----------------
    if batch_tile is None:
        ntc = _num_tensorcores()
        bp_min = _round_up(max(B, 1), 128)
        tb = _round_up(pl.cdiv(bp_min, ntc), 128) if ntc > 1 else bp_min
        tb = min(tb, max_batch_tile)
    else:
        tb = batch_tile
    bp = pl.cdiv(B, tb) * tb

    d_in_p = _round_up(max(d_in, 1), 8)
    d_out_p = _round_up(max(d_out, 1), 8)
    hb = max(H, d_out_p)

    # Lane-dense bf16 presentation of the input stream; zero padding is sound
    # (padded K rows contribute 0, padded batch columns are sliced off below).
    x_t = jnp.zeros((d_in_p, bp), cdt).at[:d_in, :B].set(x.T.astype(cdt))

    w_in_p = jnp.pad(params["w_in"], ((0, 0), (0, d_in_p - d_in)))
    w_out_p = jnp.pad(params["w_out"], ((0, d_out_p - d_out), (0, 0)))

    # Pack all biases into one resident f32 slab: col 0 = in, 1..L = hidden, L+1 = out.
    b_all = jnp.zeros((hb, L + 2), jnp.float32)
    b_all = b_all.at[:H, 0].set(params["b_in"][:, 0].astype(jnp.float32))
    for k, b in enumerate(params["b_hidden"]):
        b_all = b_all.at[:H, k + 1].set(b[:, 0].astype(jnp.float32))
    b_all = b_all.at[:d_out, L + 1].set(params["b_out"][:, 0].astype(jnp.float32))

    operands = [x_t, w_in_p]
    if L > 0:
        operands.append(jnp.stack(params["w_hidden"]))  # (L, H, H) bf16
    operands += [w_out_p, b_all]

    def resident(a):
        # Full-array block with a constant index map: same block index every grid
        # step, so Pallas keeps it VMEM-resident and skips the re-DMA.
        zeros = (0,) * a.ndim
        return pl.BlockSpec(a.shape, lambda i, z=zeros: z)

    in_specs = [pl.BlockSpec((d_in_p, tb), lambda i: (0, i))]   # streamed x tiles
    in_specs += [resident(a) for a in operands[1:]]             # resident weights/biases
    out_spec = pl.BlockSpec((d_out_p, tb), lambda i: (0, i))    # lane-dense output slab

    flops = 2 * bp * (d_in_p * H + L * H * H + H * d_out_p)
    bytes_accessed = (sum(int(a.size) * a.dtype.itemsize for a in operands)
                      + bp * d_out_p * 4)
    cost = pl.CostEstimate(flops=flops, transcendentals=0,
                           bytes_accessed=bytes_accessed)

    y_t = pl.pallas_call(
        _make_mlp_kernel(L),
        grid=(bp // tb,),
        in_specs=in_specs,
        out_specs=out_spec,
        out_shape=jax.ShapeDtypeStruct((d_out_p, bp), jnp.float32),
        compiler_params=pltpu.CompilerParams(
            dimension_semantics=("parallel",),   # batch tiles shard across TCs on v7x
            vmem_limit_bytes=64 * 1024 * 1024,   # above v5e's 16 MiB scoped default
        ),
        cost_estimate=cost,
    )(*operands)

    return y_t[:d_out, :B].T


def init_params(key, input_dim, num_hidden_layer, hidden_dim, output_dim,
                param_dtype=jnp.bfloat16):
    """nn.Linear-style init U(-1/sqrt(fan_in), 1/sqrt(fan_in)).
    Weights are (out_features, in_features) (PyTorch layout) in `param_dtype`;
    biases are (out_features, 1) in f32."""
    n_linear = num_hidden_layer + 2
    keys = jax.random.split(key, 2 * n_linear)

    def uni(k, shape, fan_in, dtype):
        bound = 1.0 / math.sqrt(fan_in)
        return jax.random.uniform(k, shape, jnp.float32, -bound, bound).astype(dtype)

    params = {
        "w_in": uni(keys[0], (hidden_dim, input_dim), input_dim, param_dtype),
        "b_in": uni(keys[1], (hidden_dim, 1), input_dim, jnp.float32),
        "w_hidden": [],
        "b_hidden": [],
    }
    for l in range(num_hidden_layer):
        params["w_hidden"].append(
            uni(keys[2 + 2 * l], (hidden_dim, hidden_dim), hidden_dim, param_dtype))
        params["b_hidden"].append(
            uni(keys[3 + 2 * l], (hidden_dim, 1), hidden_dim, jnp.float32))
    params["w_out"] = uni(keys[2 + 2 * num_hidden_layer],
                          (output_dim, hidden_dim), hidden_dim, param_dtype)
    params["b_out"] = uni(keys[3 + 2 * num_hidden_layer],
                          (output_dim, 1), hidden_dim, jnp.float32)
    return params


def reference_forward(x, params):
    """Pure-JAX reference with the same dtype pipeline as the kernel
    (operands cast to the weight dtype, f32 accumulation)."""
    def lin(h, w, b):
        return jnp.dot(h.astype(w.dtype), w.T,
                       preferred_element_type=jnp.float32) + b[:, 0]

    h = jnp.maximum(lin(x, params["w_in"], params["b_in"]), 0.0)
    for w, b in zip(params["w_hidden"], params["b_hidden"]):
        h = jnp.maximum(lin(h, w, b), 0.0)
    return lin(h, params["w_out"], params["b_out"])


if __name__ == "__main__":
    key = jax.random.PRNGKey(0)
    k_x, k_p = jax.random.split(key)

    input_dim = 4          # e.g. CartPole state dimension
    num_hidden_layer = 2   # two H x H hidden layers
    hidden_dim = 256       # multiple of 256: fills a 256x256 MXU push on v6e/v7x
    output_dim = 2         # Q-value per action
    batch = 256

    params = init_params(k_p, input_dim, num_hidden_layer, hidden_dim,
                         output_dim, param_dtype=jnp.bfloat16)
    x = jax.random.normal(k_x, (batch, input_dim), dtype=jnp.float32)

    y = deep_q_net_forward(x, params)
    y = jax.block_until_ready(y)

    y_ref = reference_forward(x, params)
    assert y.shape == (batch, output_dim)
    # Both paths do identical bf16 operand rounding + f32 MXU accumulation, so the
    # residual difference is tiny; 1e-2 tolerance is ample headroom.
    assert jnp.allclose(y, y_ref, atol=1e-2, rtol=1e-2), \
        float(jnp.max(jnp.abs(y - y_ref)))

    print("KERNEL_OK")
</pallas_src>

<mosaic_0001>
module attributes {stable_mosaic.version = 11 : i64} {
  func.func @kernel(%arg0: i32, %arg1: memref<8x256xbf16, #tpu.memory_space<vmem>>, %arg2: memref<256x8xbf16, #tpu.memory_space<vmem>>, %arg3: memref<2x256x256xbf16, #tpu.memory_space<vmem>>, %arg4: memref<8x256xbf16, #tpu.memory_space<vmem>>, %arg5: memref<256x4xf32, #tpu.memory_space<vmem>>, %arg6: memref<8x256xf32, #tpu.memory_space<vmem>>) attributes {dimension_semantics = [#tpu.dimension_semantics<parallel>], iteration_bounds = array<i64: 1>, scalar_prefetch = 0 : i64, scratch_operands = 0 : i64, tpu.core_type = #tpu.core_type<tc>, window_params = [{transform_indices = @transform_0, window_bounds = array<i64: 8, 256>}, {pipeline_mode = #tpu.pipeline_mode<synchronous>, transform_indices = @transform_1, window_bounds = array<i64: 256, 8>}, {pipeline_mode = #tpu.pipeline_mode<synchronous>, transform_indices = @transform_2, window_bounds = array<i64: 2, 256, 256>}, {pipeline_mode = #tpu.pipeline_mode<synchronous>, transform_indices = @transform_3, window_bounds = array<i64: 8, 256>}, {pipeline_mode = #tpu.pipeline_mode<synchronous>, transform_indices = @transform_4, window_bounds = array<i64: 256, 4>}, {transform_indices = @transform_5, window_bounds = array<i64: 8, 256>}]} {
    %c0 = arith.constant 0 : index
    %c0_0 = arith.constant 0 : index
    %0 = vector.load %arg5[%c0, %c0_0] : memref<256x4xf32, #tpu.memory_space<vmem>>, vector<256x4xf32>
    %c0_1 = arith.constant 0 : index
    %c0_2 = arith.constant 0 : index
    %1 = vector.load %arg2[%c0_1, %c0_2] : memref<256x8xbf16, #tpu.memory_space<vmem>>, vector<256x8xbf16>
    %c0_3 = arith.constant 0 : index
    %c0_4 = arith.constant 0 : index
    %2 = vector.load %arg1[%c0_3, %c0_4] : memref<8x256xbf16, #tpu.memory_space<vmem>>, vector<8x256xbf16>
    %cst = arith.constant dense<0.000000e+00> : vector<256x256xf32>
    %3 = tpu.matmul %1, %2, %cst {dimension_numbers = #tpu.dot_dimension_numbers<[1], [0], [0], [1], [0, 0, 1, 1], [], []>} : vector<256x8xbf16>, vector<8x256xbf16>, vector<256x256xf32> -> vector<256x256xf32>
    %4 = vector.extract_strided_slice %0 {offsets = [0, 0], sizes = [256, 1], strides = [1, 1]} : vector<256x4xf32> to vector<256x1xf32>
    %5 = vector.broadcast %4 : vector<256x1xf32> to vector<256x256xf32>
    %6 = arith.addf %3, %5 : vector<256x256xf32>
    %cst_5 = arith.constant 0.000000e+00 : f32
    %7 = vector.broadcast %cst_5 : f32 to vector<256x256xf32>
    %8 = arith.maximumf %6, %7 : vector<256x256xf32>
    %c0_6 = arith.constant 0 : index
    %c0_7 = arith.constant 0 : index
    %c0_8 = arith.constant 0 : index
    %9 = vector.load %arg3[%c0_6, %c0_7, %c0_8] : memref<2x256x256xbf16, #tpu.memory_space<vmem>>, vector<1x256x256xbf16>
    %10 = vector.shape_cast %9 : vector<1x256x256xbf16> to vector<256x256xbf16>
    %11 = arith.truncf %8 : vector<256x256xf32> to vector<256x256xbf16>
    %cst_9 = arith.constant dense<0.000000e+00> : vector<256x256xf32>
    %12 = tpu.matmul %10, %11, %cst_9 {dimension_numbers = #tpu.dot_dimension_numbers<[1], [0], [0], [1], [0, 0, 1, 1], [], []>} : vector<256x256xbf16>, vector<256x256xbf16>, vector<256x256xf32> -> vector<256x256xf32>
    %13 = vector.extract_strided_slice %0 {offsets = [0, 1], sizes = [256, 1], strides = [1, 1]} : vector<256x4xf32> to vector<256x1xf32>
    %14 = vector.broadcast %13 : vector<256x1xf32> to vector<256x256xf32>
    %15 = arith.addf %12, %14 : vector<256x256xf32>
    %cst_10 = arith.constant 0.000000e+00 : f32
    %16 = vector.broadcast %cst_10 : f32 to vector<256x256xf32>
    %17 = arith.maximumf %15, %16 : vector<256x256xf32>
    %c1 = arith.constant 1 : index
    %c0_11 = arith.constant 0 : index
    %c0_12 = arith.constant 0 : index
    %18 = vector.load %arg3[%c1, %c0_11, %c0_12] : memref<2x256x256xbf16, #tpu.memory_space<vmem>>, vector<1x256x256xbf16>
    %19 = vector.shape_cast %18 : vector<1x256x256xbf16> to vector<256x256xbf16>
    %20 = arith.truncf %17 : vector<256x256xf32> to vector<256x256xbf16>
    %cst_13 = arith.constant dense<0.000000e+00> : vector<256x256xf32>
    %21 = tpu.matmul %19, %20, %cst_13 {dimension_numbers = #tpu.dot_dimension_numbers<[1], [0], [0], [1], [0, 0, 1, 1], [], []>} : vector<256x256xbf16>, vector<256x256xbf16>, vector<256x256xf32> -> vector<256x256xf32>
    %22 = vector.extract_strided_slice %0 {offsets = [0, 2], sizes = [256, 1], strides = [1, 1]} : vector<256x4xf32> to vector<256x1xf32>
    %23 = vector.broadcast %22 : vector<256x1xf32> to vector<256x256xf32>
    %24 = arith.addf %21, %23 : vector<256x256xf32>
    %cst_14 = arith.constant 0.000000e+00 : f32
    %25 = vector.broadcast %cst_14 : f32 to vector<256x256xf32>
    %26 = arith.maximumf %24, %25 : vector<256x256xf32>
    %c0_15 = arith.constant 0 : index
    %c0_16 = arith.constant 0 : index
    %27 = vector.load %arg4[%c0_15, %c0_16] : memref<8x256xbf16, #tpu.memory_space<vmem>>, vector<8x256xbf16>
    %28 = arith.truncf %26 : vector<256x256xf32> to vector<256x256xbf16>
    %cst_17 = arith.constant dense<0.000000e+00> : vector<8x256xf32>
    %29 = tpu.matmul %27, %28, %cst_17 {dimension_numbers = #tpu.dot_dimension_numbers<[1], [0], [0], [1], [0, 0, 1, 1], [], []>} : vector<8x256xbf16>, vector<256x256xbf16>, vector<8x256xf32> -> vector<8x256xf32>
    %30 = vector.extract_strided_slice %0 {offsets = [0, 3], sizes = [8, 1], strides = [1, 1]} : vector<256x4xf32> to vector<8x1xf32>
    %31 = vector.broadcast %30 : vector<8x1xf32> to vector<8x256xf32>
    %32 = arith.addf %29, %31 : vector<8x256xf32>
    %c0_18 = arith.constant 0 : index
    %c0_19 = arith.constant 0 : index
    %33 = vector.load %arg6[%c0_18, %c0_19] : memref<8x256xf32, #tpu.memory_space<vmem>>, vector<8x256xf32>
    tpu.vector_store %arg6[%c0_18, %c0_19], %32 {strides = array<i32>} : memref<8x256xf32, #tpu.memory_space<vmem>>, vector<8x256xf32>,
    return
  }
  func.func @transform_0(%arg0: i32) -> (i32, i32) {
    %c0_i32 = arith.constant 0 : i32
    %c0_i32_0 = arith.constant 0 : i32
    return %c0_i32, %arg0 : i32, i32
  }
  func.func @transform_1(%arg0: i32) -> (i32, i32) {
    %c0_i32 = arith.constant 0 : i32
    %c0_i32_0 = arith.constant 0 : i32
    %c0_i32_1 = arith.constant 0 : i32
    return %c0_i32, %c0_i32_0 : i32, i32
  }
  func.func @transform_2(%arg0: i32) -> (i32, i32, i32) {
    %c0_i32 = arith.constant 0 : i32
    %c0_i32_0 = arith.constant 0 : i32
    %c0_i32_1 = arith.constant 0 : i32
    %c0_i32_2 = arith.constant 0 : i32
    return %c0_i32, %c0_i32_0, %c0_i32_1 : i32, i32, i32
  }
  func.func @transform_3(%arg0: i32) -> (i32, i32) {
    %c0_i32 = arith.constant 0 : i32
    %c0_i32_0 = arith.constant 0 : i32
    %c0_i32_1 = arith.constant 0 : i32
    return %c0_i32, %c0_i32_0 : i32, i32
  }
  func.func @transform_4(%arg0: i32) -> (i32, i32) {
    %c0_i32 = arith.constant 0 : i32
    %c0_i32_0 = arith.constant 0 : i32
    %c0_i32_1 = arith.constant 0 : i32
    return %c0_i32, %c0_i32_0 : i32, i32
  }
  func.func @transform_5(%arg0: i32) -> (i32, i32) {
    %c0_i32 = arith.constant 0 : i32
    %c0_i32_0 = arith.constant 0 : i32
    return %c0_i32, %arg0 : i32, i32
  }
}

</mosaic_0001>

<llo_original>
// kernel: tpu_custom_call.1
$region0: #{tpu_custom_call.1}
  #allocation0 [shape = 'u32[]', space=smem, size = 0x4, offset = 0x4, fixed_abs, tag = 'smem constant byte address 0x4 - core index']
  #allocation1 [shape = 'u32[144,128]{1,0:T(1,128)}', space=vmem, size = 0x12000, scoped, tag = 'internal scratch']
  %s0 = inlined_call_operand.hbm [shape: bf16[8,256], index: 0, kind: input, shape index: {}]
  %s1 = inlined_call_operand.hbm [shape: bf16[256,8], index: 1, kind: input, shape index: {}]
  %s2 = inlined_call_operand.hbm [shape: bf16[2,256,256], index: 2, kind: input, shape index: {}]
  %s3 = inlined_call_operand.hbm [shape: bf16[8,256], index: 3, kind: input, shape index: {}]
  %s4 = inlined_call_operand.hbm [shape: f32[256,4], index: 4, kind: input, shape index: {}]
  %s5 = inlined_call_operand.hbm [shape: f32[8,256], index: 5, kind: output, shape index: {}]
  %s6 = sld [smem:[#allocation0]]
  $region50: #{tpu_custom_call.1} parent=0
    _
  %s8 = ssub.s32 1, %s6
  %s9 = scalar_select 0, %s8, %s6
  $region1: #{tpu_custom_call.1} parent=0
    #allocation2 [shape = 'u8[4096]{0}', space=vmem, size = 0x1000, scoped, tag = 'input window, operand 0, single buffered']
    #allocation3 [shape = 's32[1]{0}', space=sflag, size = 0x4, scoped, tag = 'scoped memory for tpu_custom_call.1']
    #allocation4 [shape = 's32[1]{0}', space=sflag, size = 0x4, scoped, tag = 'scoped memory for tpu_custom_call.1']
    #allocation5 [shape = 'u8[65536]{0}', space=vmem, size = 0x10000, scoped, tag = 'input window, operand 1, single buffered']
    #allocation6 [shape = 's32[1]{0}', space=sflag, size = 0x4, scoped, tag = 'scoped memory for tpu_custom_call.1']
    #allocation7 [shape = 'u8[262144]{0}', space=vmem, size = 0x40000, scoped, tag = 'input window, operand 2, single buffered']
    #allocation8 [shape = 'u8[4096]{0}', space=vmem, size = 0x1000, scoped, tag = 'input window, operand 3, single buffered']
    #allocation9 [shape = 's32[1]{0}', space=sflag, size = 0x4, scoped, tag = 'scoped memory for tpu_custom_call.1']
    #allocation10 [shape = 'u8[131072]{0}', space=vmem, size = 0x20000, scoped, tag = 'input window, operand 4, single buffered']
    #allocation11 [shape = 'u8[8192]{0}', space=vmem, size = 0x2000, scoped, tag = 'output window, operand 0, single buffered']
    %10 = vsyncpa [#allocation3], 0
    %11 = vsyncpa [#allocation6], 0
    %12 = vsyncpa [#allocation9], 0
    %13 = vsyncpa [#allocation4], 0
    // Predicated region
    $region2: #{tpu_custom_call.1} parent=1 // pred_check
      _
    $region3: #{tpu_custom_call.1} parent=1 // pred_check_branch
      %15 = sbr.rel (0) target = $region5
    $region4: #{tpu_custom_call.1} parent=1 // pred_region
      %s17 = ssub.s32 128, 128
      %18 = vsyncadd [#allocation3], %s17
      %s20 = sshll.u32 [#allocation2], 4
      %s21 = int_to_ptr.vmem [resolvable:$true] %s20
      %23 = dma.hbm_to_vmem [thread:$0]  %s0, 128, %s21, [#allocation3]
    $region5: #{tpu_custom_call.1} parent=1 // pred_fallthru
      _
    // Predicated region
    $region6: #{tpu_custom_call.1} parent=1 // pred_check
      _
    $region7: #{tpu_custom_call.1} parent=1 // pred_check_branch
      %25 = sbr.rel (0) target = $region9
    $region8: #{tpu_custom_call.1} parent=1 // pred_region
      %s27 = ssub.s32 2048, 2048
      %28 = vsyncadd [#allocation6], %s27
      %s29 = sshll.u32 [#allocation5], 4
      %s30 = int_to_ptr.vmem [resolvable:$true] %s29
      %35 = dma.hbm_to_vmem [thread:$0]  %s1, 2048, %s30, [#allocation6], 64, 64, 4
    $region9: #{tpu_custom_call.1} parent=1 // pred_fallthru
      _
    // Predicated region
    $region10: #{tpu_custom_call.1} parent=1 // pred_check
      _
    $region11: #{tpu_custom_call.1} parent=1 // pred_check_branch
      %37 = sbr.rel (0) target = $region13
    $region12: #{tpu_custom_call.1} parent=1 // pred_region
      %s39 = ssub.s32 8192, 8192
      %40 = vsyncadd [#allocation6], %s39
      %s41 = sshll.u32 [#allocation7], 4
      %s42 = int_to_ptr.vmem [resolvable:$true] %s41
      %47 = dma.hbm_to_vmem [thread:$0]  %s2, 8192, %s42, [#allocation6], 128, 128, 8
    $region13: #{tpu_custom_call.1} parent=1 // pred_fallthru
      _
    // Predicated region
    $region14: #{tpu_custom_call.1} parent=1 // pred_check
      _
    $region15: #{tpu_custom_call.1} parent=1 // pred_check_branch
      %49 = sbr.rel (0) target = $region17
    $region16: #{tpu_custom_call.1} parent=1 // pred_region
      %s51 = ssub.s32 128, 128
      %52 = vsyncadd [#allocation9], %s51
      %s54 = sshll.u32 [#allocation8], 4
      %s55 = int_to_ptr.vmem [resolvable:$true] %s54
      %57 = dma.hbm_to_vmem [thread:$0]  %s3, 128, %s55, [#allocation9]
    $region17: #{tpu_custom_call.1} parent=1 // pred_fallthru
      _
    // Predicated region
    $region18: #{tpu_custom_call.1} parent=1 // pred_check
      _
    $region19: #{tpu_custom_call.1} parent=1 // pred_check_branch
      %59 = sbr.rel (0) target = $region21
    $region20: #{tpu_custom_call.1} parent=1 // pred_region
      %s61 = ssub.s32 4096, 4096
      %62 = vsyncadd [#allocation9], %s61
      %s63 = sshll.u32 [#allocation10], 4
      %s64 = int_to_ptr.vmem [resolvable:$true] %s63
      %69 = dma.hbm_to_vmem [thread:$0]  %s4, 4096, %s64, [#allocation9], 128, 128, 8
    $region21: #{tpu_custom_call.1} parent=1 // pred_fallthru
      _
    // Predicated region
    $region22: #{tpu_custom_call.1} parent=1 // pred_check
      _
    $region23: #{tpu_custom_call.1} parent=1 // pred_check_branch
      %71 = sbr.rel (0) target = $region25
    $region24: #{tpu_custom_call.1} parent=1 // pred_region
      %72 = dma.done [#allocation3], 128
    $region25: #{tpu_custom_call.1} parent=1 // pred_fallthru
      _
    // Predicated region
    $region26: #{tpu_custom_call.1} parent=1 // pred_check
      _
    $region27: #{tpu_custom_call.1} parent=1 // pred_check_branch
      %74 = sbr.rel (0) target = $region29
    $region28: #{tpu_custom_call.1} parent=1 // pred_region
      %75 = dma.done [#allocation6], 2048
    $region29: #{tpu_custom_call.1} parent=1 // pred_fallthru
      _
    // Predicated region
    $region30: #{tpu_custom_call.1} parent=1 // pred_check
      _
    $region31: #{tpu_custom_call.1} parent=1 // pred_check_branch
      %77 = sbr.rel (0) target = $region33
    $region32: #{tpu_custom_call.1} parent=1 // pred_region
      %78 = dma.done [#allocation6], 8192
    $region33: #{tpu_custom_call.1} parent=1 // pred_fallthru
      _
    // Predicated region
    $region34: #{tpu_custom_call.1} parent=1 // pred_check
      _
    $region35: #{tpu_custom_call.1} parent=1 // pred_check_branch
      %80 = sbr.rel (0) target = $region37
    $region36: #{tpu_custom_call.1} parent=1 // pred_region
      %81 = dma.done [#allocation9], 128
    $region37: #{tpu_custom_call.1} parent=1 // pred_fallthru
      _
    // Predicated region
    $region38: #{tpu_custom_call.1} parent=1 // pred_check
      _
    $region39: #{tpu_custom_call.1} parent=1 // pred_check_branch
      %83 = sbr.rel (0) target = $region41
    $region40: #{tpu_custom_call.1} parent=1 // pred_region
      %84 = dma.done [#allocation9], 4096
    $region41: #{tpu_custom_call.1} parent=1 // pred_fallthru
      _
    %v86 = vld [vmem:[#allocation10] sm:$0xff]
    %v87 = vld [vmem:[#allocation10 + $0x8] sm:$0xff]
    %v88 = vld [vmem:[#allocation10 + $0x10] sm:$0xff]
    %v89 = vld [vmem:[#allocation10 + $0x18] sm:$0xff]
    %v90 = vld [vmem:[#allocation10 + $0x20] sm:$0xff]
    %v91 = vld [vmem:[#allocation10 + $0x28] sm:$0xff]
    %v92 = vld [vmem:[#allocation10 + $0x30] sm:$0xff]
    %v93 = vld [vmem:[#allocation10 + $0x38] sm:$0xff]
    %v94 = vld [vmem:[#allocation10 + $0x40] sm:$0xff]
    %v95 = vld [vmem:[#allocation10 + $0x48] sm:$0xff]
    %v96 = vld [vmem:[#allocation10 + $0x50] sm:$0xff]
    %v97 = vld [vmem:[#allocation10 + $0x58] sm:$0xff]
    %v98 = vld [vmem:[#allocation10 + $0x60] sm:$0xff]
    %v99 = vld [vmem:[#allocation10 + $0x68] sm:$0xff]
    %v100 = vld [vmem:[#allocation10 + $0x70] sm:$0xff]
    %v101 = vld [vmem:[#allocation10 + $0x78] sm:$0xff]
    %v102 = vld [vmem:[#allocation10 + $0x80] sm:$0xff]
    %v103 = vld [vmem:[#allocation10 + $0x88] sm:$0xff]
    %v104 = vld [vmem:[#allocation10 + $0x90] sm:$0xff]
    %v105 = vld [vmem:[#allocation10 + $0x98] sm:$0xff]
    %v106 = vld [vmem:[#allocation10 + $0xa0] sm:$0xff]
    %v107 = vld [vmem:[#allocation10 + $0xa8] sm:$0xff]
    %v108 = vld [vmem:[#allocation10 + $0xb0] sm:$0xff]
    %v109 = vld [vmem:[#allocation10 + $0xb8] sm:$0xff]
    %v110 = vld [vmem:[#allocation10 + $0xc0] sm:$0xff]
    %v111 = vld [vmem:[#allocation10 + $0xc8] sm:$0xff]
    %v112 = vld [vmem:[#allocation10 + $0xd0] sm:$0xff]
    %v113 = vld [vmem:[#allocation10 + $0xd8] sm:$0xff]
    %v114 = vld [vmem:[#allocation10 + $0xe0] sm:$0xff]
    %v115 = vld [vmem:[#allocation10 + $0xe8] sm:$0xff]
    %v116 = vld [vmem:[#allocation10 + $0xf0] sm:$0xff]
    %v117 = vld [vmem:[#allocation10 + $0xf8] sm:$0xff]
    %v118 = vld [vmem:[#allocation5] sm:$0xf]
    %v119 = vld [vmem:[#allocation5 + $0x4] sm:$0xf]
    %v120 = vld [vmem:[#allocation5 + $0x8] sm:$0xf]
    %v121 = vld [vmem:[#allocation5 + $0xc] sm:$0xf]
    %v122 = vld [vmem:[#allocation5 + $0x10] sm:$0xf]
    %v123 = vld [vmem:[#allocation5 + $0x14] sm:$0xf]
    %v124 = vld [vmem:[#allocation5 + $0x18] sm:$0xf]
    %v125 = vld [vmem:[#allocation5 + $0x1c] sm:$0xf]
    %v126 = vld [vmem:[#allocation5 + $0x20] sm:$0xf]
    %v127 = vld [vmem:[#allocation5 + $0x24] sm:$0xf]
    %v128 = vld [vmem:[#allocation5 + $0x28] sm:$0xf]
    %v129 = vld [vmem:[#allocation5 + $0x2c] sm:$0xf]
    %v130 = vld [vmem:[#allocation5 + $0x30] sm:$0xf]
    %v131 = vld [vmem:[#allocation5 + $0x34] sm:$0xf]
    %v132 = vld [vmem:[#allocation5 + $0x38] sm:$0xf]
    %v133 = vld [vmem:[#allocation5 + $0x3c] sm:$0xf]
    %v134 = vld [vmem:[#allocation5 + $0x40] sm:$0xf]
    %v135 = vld [vmem:[#allocation5 + $0x44] sm:$0xf]
    %v136 = vld [vmem:[#allocation5 + $0x48] sm:$0xf]
    %v137 = vld [vmem:[#allocation5 + $0x4c] sm:$0xf]
    %v138 = vld [vmem:[#allocation5 + $0x50] sm:$0xf]
    %v139 = vld [vmem:[#allocation5 + $0x54] sm:$0xf]
    %v140 = vld [vmem:[#allocation5 + $0x58] sm:$0xf]
    %v141 = vld [vmem:[#allocation5 + $0x5c] sm:$0xf]
    %v142 = vld [vmem:[#allocation5 + $0x60] sm:$0xf]
    %v143 = vld [vmem:[#allocation5 + $0x64] sm:$0xf]
    %v144 = vld [vmem:[#allocation5 + $0x68] sm:$0xf]
    %v145 = vld [vmem:[#allocation5 + $0x6c] sm:$0xf]
    %v146 = vld [vmem:[#allocation5 + $0x70] sm:$0xf]
    %v147 = vld [vmem:[#allocation5 + $0x74] sm:$0xf]
    %v148 = vld [vmem:[#allocation5 + $0x78] sm:$0xf]
    %v149 = vld [vmem:[#allocation5 + $0x7c] sm:$0xf]
    %v150 = vld [vmem:[#allocation2] sm:$0xff]
    %152 = vset.pattern.permute.xlu0 0
    %153 = vperm.xlu0 %152, %v86
    %v154 = vpop.permute.xlu0 %153
    %157 = vset.pattern.permute.xlu0 0
    %158 = vperm.xlu0 %157, %v87
    %v159 = vpop.permute.xlu0 %158
    %162 = vset.pattern.permute.xlu0 0
    %163 = vperm.xlu0 %162, %v88
    %v164 = vpop.permute.xlu0 %163
    %167 = vset.pattern.permute.xlu0 0
    %168 = vperm.xlu0 %167, %v89
    %v169 = vpop.permute.xlu0 %168
    %172 = vset.pattern.permute.xlu0 0
    %173 = vperm.xlu0 %172, %v90
    %v174 = vpop.permute.xlu0 %173
    %177 = vset.pattern.permute.xlu0 0
    %178 = vperm.xlu0 %177, %v91
    %v179 = vpop.permute.xlu0 %178
    %182 = vset.pattern.permute.xlu0 0
    %183 = vperm.xlu0 %182, %v92
    %v184 = vpop.permute.xlu0 %183
    %187 = vset.pattern.permute.xlu0 0
    %188 = vperm.xlu0 %187, %v93
    %v189 = vpop.permute.xlu0 %188
    %192 = vset.pattern.permute.xlu0 0
    %193 = vperm.xlu0 %192, %v94
    %v194 = vpop.permute.xlu0 %193
    %197 = vset.pattern.permute.xlu0 0
    %198 = vperm.xlu0 %197, %v95
    %v199 = vpop.permute.xlu0 %198
    %202 = vset.pattern.permute.xlu0 0
    %203 = vperm.xlu0 %202, %v96
    %v204 = vpop.permute.xlu0 %203
    %207 = vset.pattern.permute.xlu0 0
    %208 = vperm.xlu0 %207, %v97
    %v209 = vpop.permute.xlu0 %208
    %212 = vset.pattern.permute.xlu0 0
    %213 = vperm.xlu0 %212, %v98
    %v214 = vpop.permute.xlu0 %213
    %217 = vset.pattern.permute.xlu0 0
    %218 = vperm.xlu0 %217, %v99
    %v219 = vpop.permute.xlu0 %218
    %222 = vset.pattern.permute.xlu0 0
    %223 = vperm.xlu0 %222, %v100
    %v224 = vpop.permute.xlu0 %223
    %227 = vset.pattern.permute.xlu0 0
    %228 = vperm.xlu0 %227, %v101
    %v229 = vpop.permute.xlu0 %228
    %232 = vset.pattern.permute.xlu0 0
    %233 = vperm.xlu0 %232, %v102
    %v234 = vpop.permute.xlu0 %233
    %237 = vset.pattern.permute.xlu0 0
    %238 = vperm.xlu0 %237, %v103
    %v239 = vpop.permute.xlu0 %238
    %242 = vset.pattern.permute.xlu0 0
    %243 = vperm.xlu0 %242, %v104
    %v244 = vpop.permute.xlu0 %243
    %247 = vset.pattern.permute.xlu0 0
    %248 = vperm.xlu0 %247, %v105
    %v249 = vpop.permute.xlu0 %248
    %252 = vset.pattern.permute.xlu0 0
    %253 = vperm.xlu0 %252, %v106
    %v254 = vpop.permute.xlu0 %253
    %257 = vset.pattern.permute.xlu0 0
    %258 = vperm.xlu0 %257, %v107
    %v259 = vpop.permute.xlu0 %258
    %262 = vset.pattern.permute.xlu0 0
    %263 = vperm.xlu0 %262, %v108
    %v264 = vpop.permute.xlu0 %263
    %267 = vset.pattern.permute.xlu0 0
    %268 = vperm.xlu0 %267, %v109
    %v269 = vpop.permute.xlu0 %268
    %272 = vset.pattern.permute.xlu0 0
    %273 = vperm.xlu0 %272, %v110
    %v274 = vpop.permute.xlu0 %273
    %277 = vset.pattern.permute.xlu0 0
    %278 = vperm.xlu0 %277, %v111
    %v279 = vpop.permute.xlu0 %278
    %282 = vset.pattern.permute.xlu0 0
    %283 = vperm.xlu0 %282, %v112
    %v284 = vpop.permute.xlu0 %283
    %287 = vset.pattern.permute.xlu0 0
    %288 = vperm.xlu0 %287, %v113
    %v289 = vpop.permute.xlu0 %288
    %292 = vset.pattern.permute.xlu0 0
    %293 = vperm.xlu0 %292, %v114
    %v294 = vpop.permute.xlu0 %293
    %297 = vset.pattern.permute.xlu0 0
    %298 = vperm.xlu0 %297, %v115
    %v299 = vpop.permute.xlu0 %298
    %302 = vset.pattern.permute.xlu0 0
    %303 = vperm.xlu0 %302, %v116
    %v304 = vpop.permute.xlu0 %303
    %307 = vset.pattern.permute.xlu0 0
    %308 = vperm.xlu0 %307, %v117
    %v309 = vpop.permute.xlu0 %308
    %v343 = vunpack.c.l.b16 %v118
    %v344 = vunpack.c.l.b16 %v119
    %v345 = vunpack.c.l.b16 %v120
    %v346 = vunpack.c.l.b16 %v121
    %v347 = vunpack.c.l.b16 %v122
    %v348 = vunpack.c.l.b16 %v123
    %v349 = vunpack.c.l.b16 %v124
    %v350 = vunpack.c.l.b16 %v125
    %v351 = vunpack.c.l.b16 %v126
    %v352 = vunpack.c.l.b16 %v127
    %v353 = vunpack.c.l.b16 %v128
    %v354 = vunpack.c.l.b16 %v129
    %v355 = vunpack.c.l.b16 %v130
    %v356 = vunpack.c.l.b16 %v131
    %v357 = vunpack.c.l.b16 %v132
    %v358 = vunpack.c.l.b16 %v133
    %v359 = vunpack.c.l.b16 %v134
    %v360 = vunpack.c.l.b16 %v135
    %v361 = vunpack.c.l.b16 %v136
    %v362 = vunpack.c.l.b16 %v137
    %v363 = vunpack.c.l.b16 %v138
    %v364 = vunpack.c.l.b16 %v139
    %v365 = vunpack.c.l.b16 %v140
    %v366 = vunpack.c.l.b16 %v141
    %v367 = vunpack.c.l.b16 %v142
    %v368 = vunpack.c.l.b16 %v143
    %v369 = vunpack.c.l.b16 %v144
    %v370 = vunpack.c.l.b16 %v145
    %v371 = vunpack.c.l.b16 %v146
    %v372 = vunpack.c.l.b16 %v147
    %v373 = vunpack.c.l.b16 %v148
    %v374 = vunpack.c.l.b16 %v149
    %v375 = vpack.c.b16 %v344, %v343
    %v376 = vpack.c.b16 %v346, %v345
    %v377 = vpack.c.b16 %v348, %v347
    %v378 = vpack.c.b16 %v350, %v349
    %v379 = vpack.c.b16 %v352, %v351
    %v380 = vpack.c.b16 %v354, %v353
    %v381 = vpack.c.b16 %v356, %v355
    %v382 = vpack.c.b16 %v358, %v357
    %v383 = vpack.c.b16 %v360, %v359
    %v384 = vpack.c.b16 %v362, %v361
    %v385 = vpack.c.b16 %v364, %v363
    %v386 = vpack.c.b16 %v366, %v365
    %v387 = vpack.c.b16 %v368, %v367
    %v388 = vpack.c.b16 %v370, %v369
    %v389 = vpack.c.b16 %v372, %v371
    %v390 = vpack.c.b16 %v374, %v373
    %v392 = vunpack.c.l.b16 %v150
    %v393 = vunpack.c.h.b16 %v150
    %v394 = vpack.c.b16 %v392, %v392
    %v395 = vpack.c.b16 %v393, %v393
    %vm396 = vcmask 64512
    %v398 = vsel %vm396, %v375, 0
    %v401 = vsel %vm396, %v376, 0
    %v404 = vsel %vm396, %v377, 0
    %v407 = vsel %vm396, %v378, 0
    %v410 = vsel %vm396, %v379, 0
    %v413 = vsel %vm396, %v380, 0
    %v416 = vsel %vm396, %v381, 0
    %v419 = vsel %vm396, %v382, 0
    %v422 = vsel %vm396, %v383, 0
    %v425 = vsel %vm396, %v384, 0
    %v428 = vsel %vm396, %v385, 0
    %v431 = vsel %vm396, %v386, 0
    %v434 = vsel %vm396, %v387, 0
    %v437 = vsel %vm396, %v388, 0
    %v440 = vsel %vm396, %v389, 0
    %v443 = vsel %vm396, %v390, 0
    %vm445 = vcmask 1043456
    %v447 = vsel %vm445, %v394, 0
    %v450 = vsel %vm445, %v395, 0
    %452 = vmatprep.subr.bf16.mxu0 %v450
    %453 = vmatpush1.bf16.msra.mxu0 %v447
    %454 = vmatprep.subr.bf16.mxu0 0
    %455 = vmatpush1.bf16.msra.mxu0 0
    %456 = vmatprep.subr.bf16.mxu0 0
    %457 = vmatpush1.bf16.msra.mxu0 0
    %458 = vmatprep.subr.bf16.mxu0 0
    %459 = vmatpush1.bf16.msra.mxu0 0
    %460 = vmatprep.subr.bf16.mxu0 0
    %461 = vmatpush1.bf16.msra.mxu0 0
    %462 = vmatprep.subr.bf16.mxu0 0
    %463 = vmatpush1.bf16.msra.mxu0 0
    %464 = vmatprep.subr.bf16.mxu0 0
    %465 = vmatpush1.bf16.msra.mxu0 0
    %466 = vmatprep.subr.bf16.mxu0 0
    %467 = vmatpush1.bf16.msra.mxu0 0
    %468 = vmatprep.subr.bf16.mxu0 0
    %469 = vmatpush1.bf16.msra.mxu0 0
    %470 = vmatprep.subr.bf16.mxu0 0
    %471 = vmatpush1.bf16.msra.mxu0 0
    %472 = vmatprep.subr.bf16.mxu0 0
    %473 = vmatpush1.bf16.msra.mxu0 0
    %474 = vmatprep.subr.bf16.mxu0 0
    %475 = vmatpush1.bf16.msra.mxu0 0
    %476 = vmatprep.subr.bf16.mxu0 0
    %477 = vmatpush1.bf16.msra.mxu0 0
    %478 = vmatprep.subr.bf16.mxu0 0
    %479 = vmatpush1.bf16.msra.mxu0 0
    %480 = vmatprep.subr.bf16.mxu0 0
    %481 = vmatpush1.bf16.msra.mxu0 0
    %482 = vmatprep.subr.bf16.mxu0 0
    %483 = vmatpush1.bf16.msra.mxu0 0
    %484 = vmatprep.mubr.bf16.mxu0 0
    %485 = vmatmul.mubr.bf16.gmra.mrb[0].mxu0 %v398
    %v486 = vpop.f32.mrb[0].mxu0
    %v487 = vadd.f32 %v154, %v486
    %v488 = vpop.f32.mrb[0].mxu0
    %v489 = vadd.f32 %v154, %v488
    %v490 = vpop.f32.mrb[0].mxu0
    %v491 = vadd.f32 %v159, %v490
    %v492 = vpop.f32.mrb[0].mxu0
    %v493 = vadd.f32 %v159, %v492
    %494 = vmatprep.mubr.bf16.mxu0 0
    %495 = vmatmul.mubr.bf16.gmra.mrb[0].mxu0 %v401
    %v496 = vpop.f32.mrb[0].mxu0
    %v497 = vadd.f32 %v164, %v496
    %v498 = vpop.f32.mrb[0].mxu0
    %v499 = vadd.f32 %v164, %v498
    %v500 = vpop.f32.mrb[0].mxu0
    %v501 = vadd.f32 %v169, %v500
    %v502 = vpop.f32.mrb[0].mxu0
    %v503 = vadd.f32 %v169, %v502
    %504 = vmatprep.mubr.bf16.mxu0 0
    %505 = vmatmul.mubr.bf16.gmra.mrb[0].mxu0 %v404
    %v506 = vpop.f32.mrb[0].mxu0
    %v507 = vadd.f32 %v174, %v506
    %v508 = vpop.f32.mrb[0].mxu0
    %v509 = vadd.f32 %v174, %v508
    %v510 = vpop.f32.mrb[0].mxu0
    %v511 = vadd.f32 %v179, %v510
    %v512 = vpop.f32.mrb[0].mxu0
    %v513 = vadd.f32 %v179, %v512
    %514 = vmatprep.mubr.bf16.mxu0 0
    %515 = vmatmul.mubr.bf16.gmra.mrb[0].mxu0 %v407
    %v516 = vpop.f32.mrb[0].mxu0
    %v517 = vadd.f32 %v184, %v516
    %v518 = vpop.f32.mrb[0].mxu0
    %v519 = vadd.f32 %v184, %v518
    %v520 = vpop.f32.mrb[0].mxu0
    %v521 = vadd.f32 %v189, %v520
    %v522 = vpop.f32.mrb[0].mxu0
    %v523 = vadd.f32 %v189, %v522
    %524 = vmatprep.mubr.bf16.mxu0 0
    %525 = vmatmul.mubr.bf16.gmra.mrb[0].mxu0 %v410
    %v526 = vpop.f32.mrb[0].mxu0
    %v527 = vadd.f32 %v194, %v526
    %v528 = vpop.f32.mrb[0].mxu0
    %v529 = vadd.f32 %v194, %v528
    %v530 = vpop.f32.mrb[0].mxu0
    %v531 = vadd.f32 %v199, %v530
    %v532 = vpop.f32.mrb[0].mxu0
    %v533 = vadd.f32 %v199, %v532
    %534 = vmatprep.mubr.bf16.mxu0 0
    %535 = vmatmul.mubr.bf16.gmra.mrb[0].mxu0 %v413
    %v536 = vpop.f32.mrb[0].mxu0
    %v537 = vadd.f32 %v204, %v536
    %v538 = vpop.f32.mrb[0].mxu0
    %v539 = vadd.f32 %v204, %v538
    %v540 = vpop.f32.mrb[0].mxu0
    %v541 = vadd.f32 %v209, %v540
    %v542 = vpop.f32.mrb[0].mxu0
    %v543 = vadd.f32 %v209, %v542
    %544 = vmatprep.mubr.bf16.mxu0 0
    %545 = vmatmul.mubr.bf16.gmra.mrb[0].mxu0 %v416
    %v546 = vpop.f32.mrb[0].mxu0
    %v547 = vadd.f32 %v214, %v546
    %v548 = vpop.f32.mrb[0].mxu0
    %v549 = vadd.f32 %v214, %v548
    %v550 = vpop.f32.mrb[0].mxu0
    %v551 = vadd.f32 %v219, %v550
    %v552 = vpop.f32.mrb[0].mxu0
    %v553 = vadd.f32 %v219, %v552
    %554 = vmatprep.mubr.bf16.mxu0 0
    %555 = vmatmul.mubr.bf16.gmra.mrb[0].mxu0 %v419
    %v556 = vpop.f32.mrb[0].mxu0
    %v557 = vadd.f32 %v224, %v556
    %v558 = vpop.f32.mrb[0].mxu0
    %v559 = vadd.f32 %v224, %v558
    %v560 = vpop.f32.mrb[0].mxu0
    %v561 = vadd.f32 %v229, %v560
    %v562 = vpop.f32.mrb[0].mxu0
    %v563 = vadd.f32 %v229, %v562
    %564 = vmatprep.mubr.bf16.mxu0 0
    %565 = vmatmul.mubr.bf16.gmra.mrb[0].mxu0 %v422
    %v566 = vpop.f32.mrb[0].mxu0
    %v567 = vadd.f32 %v234, %v566
    %v568 = vpop.f32.mrb[0].mxu0
    %v569 = vadd.f32 %v234, %v568
    %v570 = vpop.f32.mrb[0].mxu0
    %v571 = vadd.f32 %v239, %v570
    %v572 = vpop.f32.mrb[0].mxu0
    %v573 = vadd.f32 %v239, %v572
    %574 = vmatprep.mubr.bf16.mxu0 0
    %575 = vmatmul.mubr.bf16.gmra.mrb[0].mxu0 %v425
    %v576 = vpop.f32.mrb[0].mxu0
    %v577 = vadd.f32 %v244, %v576
    %v578 = vpop.f32.mrb[0].mxu0
    %v579 = vadd.f32 %v244, %v578
    %v580 = vpop.f32.mrb[0].mxu0
    %v581 = vadd.f32 %v249, %v580
    %v582 = vpop.f32.mrb[0].mxu0
    %v583 = vadd.f32 %v249, %v582
    %584 = vmatprep.mubr.bf16.mxu0 0
    %585 = vmatmul.mubr.bf16.gmra.mrb[0].mxu0 %v428
    %v586 = vpop.f32.mrb[0].mxu0
    %v587 = vadd.f32 %v254, %v586
    %v588 = vpop.f32.mrb[0].mxu0
    %v589 = vadd.f32 %v254, %v588
    %v590 = vpop.f32.mrb[0].mxu0
    %v591 = vadd.f32 %v259, %v590
    %v592 = vpop.f32.mrb[0].mxu0
    %v593 = vadd.f32 %v259, %v592
    %594 = vmatprep.mubr.bf16.mxu0 0
    %595 = vmatmul.mubr.bf16.gmra.mrb[0].mxu0 %v431
    %v596 = vpop.f32.mrb[0].mxu0
    %v597 = vadd.f32 %v264, %v596
    %v598 = vpop.f32.mrb[0].mxu0
    %v599 = vadd.f32 %v264, %v598
    %v600 = vpop.f32.mrb[0].mxu0
    %v601 = vadd.f32 %v269, %v600
    %v602 = vpop.f32.mrb[0].mxu0
    %v603 = vadd.f32 %v269, %v602
    %604 = vmatprep.mubr.bf16.mxu0 0
    %605 = vmatmul.mubr.bf16.gmra.mrb[0].mxu0 %v434
    %v606 = vpop.f32.mrb[0].mxu0
    %v607 = vadd.f32 %v274, %v606
    %v608 = vpop.f32.mrb[0].mxu0
    %v609 = vadd.f32 %v274, %v608
    %v610 = vpop.f32.mrb[0].mxu0
    %v611 = vadd.f32 %v279, %v610
    %v612 = vpop.f32.mrb[0].mxu0
    %v613 = vadd.f32 %v279, %v612
    %614 = vmatprep.mubr.bf16.mxu0 0
    %615 = vmatmul.mubr.bf16.gmra.mrb[0].mxu0 %v437
    %v616 = vpop.f32.mrb[0].mxu0
    %v617 = vadd.f32 %v284, %v616
    %v618 = vpop.f32.mrb[0].mxu0
    %v619 = vadd.f32 %v284, %v618
    %v620 = vpop.f32.mrb[0].mxu0
    %v621 = vadd.f32 %v289, %v620
    %v622 = vpop.f32.mrb[0].mxu0
    %v623 = vadd.f32 %v289, %v622
    %624 = vmatprep.mubr.bf16.mxu0 0
    %625 = vmatmul.mubr.bf16.gmra.mrb[0].mxu0 %v440
    %v626 = vpop.f32.mrb[0].mxu0
    %v627 = vadd.f32 %v294, %v626
    %v628 = vpop.f32.mrb[0].mxu0
    %v629 = vadd.f32 %v294, %v628
    %v630 = vpop.f32.mrb[0].mxu0
    %v631 = vadd.f32 %v299, %v630
    %v632 = vpop.f32.mrb[0].mxu0
    %v633 = vadd.f32 %v299, %v632
    %634 = vmatprep.mubr.bf16.mxu0 0
    %635 = vmatmul.mubr.bf16.gmra.mrb[0].mxu0 %v443
    %v636 = vpop.f32.mrb[0].mxu0
    %v637 = vadd.f32 %v304, %v636
    %v638 = vpop.f32.mrb[0].mxu0
    %v639 = vadd.f32 %v304, %v638
    %v640 = vpop.f32.mrb[0].mxu0
    %v641 = vadd.f32 %v309, %v640
    %v642 = vpop.f32.mrb[0].mxu0
    %v643 = vadd.f32 %v309, %v642
    %644 = vdwg.mxu0
    %v645 = vmax.f32 %v487, 0.0
    %v646 = vmax.f32 %v489, 0.0
    %v647 = vmax.f32 %v491, 0.0
    %v648 = vmax.f32 %v493, 0.0
    %v649 = vmax.f32 %v497, 0.0
    %v650 = vmax.f32 %v499, 0.0
    %v651 = vmax.f32 %v501, 0.0
    %v652 = vmax.f32 %v503, 0.0
    %v653 = vmax.f32 %v507, 0.0
    %v654 = vmax.f32 %v509, 0.0
    %v655 = vmax.f32 %v511, 0.0
    %v656 = vmax.f32 %v513, 0.0
    %v657 = vmax.f32 %v517, 0.0
    %v658 = vmax.f32 %v519, 0.0
    %v659 = vmax.f32 %v521, 0.0
    %v660 = vmax.f32 %v523, 0.0
    %v661 = vmax.f32 %v527, 0.0
    %v662 = vmax.f32 %v529, 0.0
    %v663 = vmax.f32 %v531, 0.0
    %v664 = vmax.f32 %v533, 0.0
    %v665 = vmax.f32 %v537, 0.0
    %v666 = vmax.f32 %v539, 0.0
    %v667 = vmax.f32 %v541, 0.0
    %v668 = vmax.f32 %v543, 0.0
    %v669 = vmax.f32 %v547, 0.0
    %v670 = vmax.f32 %v549, 0.0
    %v671 = vmax.f32 %v551, 0.0
    %v672 = vmax.f32 %v553, 0.0
    %v673 = vmax.f32 %v557, 0.0
    %v674 = vmax.f32 %v559, 0.0
    %v675 = vmax.f32 %v561, 0.0
    %v676 = vmax.f32 %v563, 0.0
    %v677 = vmax.f32 %v567, 0.0
    %v678 = vmax.f32 %v569, 0.0
    %v679 = vmax.f32 %v571, 0.0
    %v680 = vmax.f32 %v573, 0.0
    %v681 = vmax.f32 %v577, 0.0
    %v682 = vmax.f32 %v579, 0.0
    %v683 = vmax.f32 %v581, 0.0
    %v684 = vmax.f32 %v583, 0.0
    %v685 = vmax.f32 %v587, 0.0
    %v686 = vmax.f32 %v589, 0.0
    %v687 = vmax.f32 %v591, 0.0
    %v688 = vmax.f32 %v593, 0.0
    %v689 = vmax.f32 %v597, 0.0
    %v690 = vmax.f32 %v599, 0.0
    %v691 = vmax.f32 %v601, 0.0
    %v692 = vmax.f32 %v603, 0.0
    %v693 = vmax.f32 %v607, 0.0
    %v694 = vmax.f32 %v609, 0.0
    %v695 = vmax.f32 %v611, 0.0
    %v696 = vmax.f32 %v613, 0.0
    %v697 = vmax.f32 %v617, 0.0
    %v698 = vmax.f32 %v619, 0.0
    %v699 = vmax.f32 %v621, 0.0
    %v700 = vmax.f32 %v623, 0.0
    %v701 = vmax.f32 %v627, 0.0
    %v702 = vmax.f32 %v629, 0.0
    %v703 = vmax.f32 %v631, 0.0
    %v704 = vmax.f32 %v633, 0.0
    %v705 = vmax.f32 %v637, 0.0
    %v706 = vmax.f32 %v639, 0.0
    %v707 = vmax.f32 %v641, 0.0
    %v708 = vmax.f32 %v643, 0.0
    %v709 = vld [vmem:[#allocation7] sm:$0xff]
    %v710 = vld [vmem:[#allocation7 + $0x8] sm:$0xff]
    %v711 = vld [vmem:[#allocation7 + $0x10] sm:$0xff]
    %v712 = vld [vmem:[#allocation7 + $0x18] sm:$0xff]
    %v713 = vld [vmem:[#allocation7 + $0x20] sm:$0xff]
    %v714 = vld [vmem:[#allocation7 + $0x28] sm:$0xff]
    %v715 = vld [vmem:[#allocation7 + $0x30] sm:$0xff]
    %v716 = vld [vmem:[#allocation7 + $0x38] sm:$0xff]
    %v717 = vld [vmem:[#allocation7 + $0x40] sm:$0xff]
    %v718 = vld [vmem:[#allocation7 + $0x48] sm:$0xff]
    %v719 = vld [vmem:[#allocation7 + $0x50] sm:$0xff]
    %v720 = vld [vmem:[#allocation7 + $0x58] sm:$0xff]
    %v721 = vld [vmem:[#allocation7 + $0x60] sm:$0xff]
    %v722 = vld [vmem:[#allocation7 + $0x68] sm:$0xff]
    %v723 = vld [vmem:[#allocation7 + $0x70] sm:$0xff]
    %v724 = vld [vmem:[#allocation7 + $0x78] sm:$0xff]
    %v725 = vld [vmem:[#allocation7 + $0x80] sm:$0xff]
    %v726 = vld [vmem:[#allocation7 + $0x88] sm:$0xff]
    %v727 = vld [vmem:[#allocation7 + $0x90] sm:$0xff]
    %v728 = vld [vmem:[#allocation7 + $0x98] sm:$0xff]
    %v729 = vld [vmem:[#allocation7 + $0xa0] sm:$0xff]
    %v730 = vld [vmem:[#allocation7 + $0xa8] sm:$0xff]
    %v731 = vld [vmem:[#allocation7 + $0xb0] sm:$0xff]
    %v732 = vld [vmem:[#allocation7 + $0xb8] sm:$0xff]
    %v733 = vld [vmem:[#allocation7 + $0xc0] sm:$0xff]
    %v734 = vld [vmem:[#allocation7 + $0xc8] sm:$0xff]
    %v735 = vld [vmem:[#allocation7 + $0xd0] sm:$0xff]
    %v736 = vld [vmem:[#allocation7 + $0xd8] sm:$0xff]
    %v737 = vld [vmem:[#allocation7 + $0xe0] sm:$0xff]
    %v738 = vld [vmem:[#allocation7 + $0xe8] sm:$0xff]
    %v739 = vld [vmem:[#allocation7 + $0xf0] sm:$0xff]
    %v740 = vld [vmem:[#allocation7 + $0xf8] sm:$0xff]
    %v741 = vpack.c.bf16 %v647, %v645
    %v742 = vpack.c.bf16 %v648, %v646
    %v743 = vpack.c.bf16 %v651, %v649
    %v744 = vpack.c.bf16 %v652, %v650
    %v745 = vpack.c.bf16 %v655, %v653
    %v746 = vpack.c.bf16 %v656, %v654
    %v747 = vpack.c.bf16 %v659, %v657
    %v748 = vpack.c.bf16 %v660, %v658
    %v749 = vpack.c.bf16 %v663, %v661
    %v750 = vpack.c.bf16 %v664, %v662
    %v751 = vpack.c.bf16 %v667, %v665
    %v752 = vpack.c.bf16 %v668, %v666
    %v753 = vpack.c.bf16 %v671, %v669
    %v754 = vpack.c.bf16 %v672, %v670
    %v755 = vpack.c.bf16 %v675, %v673
    %v756 = vpack.c.bf16 %v676, %v674
    %v757 = vpack.c.bf16 %v679, %v677
    %v758 = vpack.c.bf16 %v680, %v678
    %v759 = vpack.c.bf16 %v683, %v681
    %v760 = vpack.c.bf16 %v684, %v682
    %v761 = vpack.c.bf16 %v687, %v685
    %v762 = vpack.c.bf16 %v688, %v686
    %v763 = vpack.c.bf16 %v691, %v689
    %v764 = vpack.c.bf16 %v692, %v690
    %v765 = vpack.c.bf16 %v695, %v693
    %v766 = vpack.c.bf16 %v696, %v694
    %v767 = vpack.c.bf16 %v699, %v697
    %v768 = vpack.c.bf16 %v700, %v698
    %v769 = vpack.c.bf16 %v703, %v701
    %v770 = vpack.c.bf16 %v704, %v702
    %v771 = vpack.c.bf16 %v707, %v705
    %v772 = vpack.c.bf16 %v708, %v706
    %773 = vset.pattern.permute.xlu0 1
    %774 = vperm.xlu0 %773, %v86
    %v775 = vpop.permute.xlu0 %774
    %777 = vset.pattern.permute.xlu0 1
    %778 = vperm.xlu0 %777, %v87
    %v779 = vpop.permute.xlu0 %778
    %781 = vset.pattern.permute.xlu0 1
    %782 = vperm.xlu0 %781, %v88
    %v783 = vpop.permute.xlu0 %782
    %785 = vset.pattern.permute.xlu0 1
    %786 = vperm.xlu0 %785, %v89
    %v787 = vpop.permute.xlu0 %786
    %789 = vset.pattern.permute.xlu0 1
    %790 = vperm.xlu0 %789, %v90
    %v791 = vpop.permute.xlu0 %790
    %793 = vset.pattern.permute.xlu0 1
    %794 = vperm.xlu0 %793, %v91
    %v795 = vpop.permute.xlu0 %794
    %797 = vset.pattern.permute.xlu0 1
    %798 = vperm.xlu0 %797, %v92
    %v799 = vpop.permute.xlu0 %798
    %801 = vset.pattern.permute.xlu0 1
    %802 = vperm.xlu0 %801, %v93
    %v803 = vpop.permute.xlu0 %802
    %805 = vset.pattern.permute.xlu0 1
    %806 = vperm.xlu0 %805, %v94
    %v807 = vpop.permute.xlu0 %806
    %809 = vset.pattern.permute.xlu0 1
    %810 = vperm.xlu0 %809, %v95
    %v811 = vpop.permute.xlu0 %810
    %813 = vset.pattern.permute.xlu0 1
    %814 = vperm.xlu0 %813, %v96
    %v815 = vpop.permute.xlu0 %814
    %817 = vset.pattern.permute.xlu0 1
    %818 = vperm.xlu0 %817, %v97
    %v819 = vpop.permute.xlu0 %818
    %821 = vset.pattern.permute.xlu0 1
    %822 = vperm.xlu0 %821, %v98
    %v823 = vpop.permute.xlu0 %822
    %825 = vset.pattern.permute.xlu0 1
    %826 = vperm.xlu0 %825, %v99
    %v827 = vpop.permute.xlu0 %826
    %829 = vset.pattern.permute.xlu0 1
    %830 = vperm.xlu0 %829, %v100
    %v831 = vpop.permute.xlu0 %830
    %833 = vset.pattern.permute.xlu0 1
    %834 = vperm.xlu0 %833, %v101
    %v835 = vpop.permute.xlu0 %834
    %837 = vset.pattern.permute.xlu0 1
    %838 = vperm.xlu0 %837, %v102
    %v839 = vpop.permute.xlu0 %838
    %841 = vset.pattern.permute.xlu0 1
    %842 = vperm.xlu0 %841, %v103
    %v843 = vpop.permute.xlu0 %842
    %845 = vset.pattern.permute.xlu0 1
    %846 = vperm.xlu0 %845, %v104
    %v847 = vpop.permute.xlu0 %846
    %849 = vset.pattern.permute.xlu0 1
    %850 = vperm.xlu0 %849, %v105
    %v851 = vpop.permute.xlu0 %850
    %853 = vset.pattern.permute.xlu0 1
    %854 = vperm.xlu0 %853, %v106
    %v855 = vpop.permute.xlu0 %854
    %857 = vset.pattern.permute.xlu0 1
    %858 = vperm.xlu0 %857, %v107
    %v859 = vpop.permute.xlu0 %858
    %861 = vset.pattern.permute.xlu0 1
    %862 = vperm.xlu0 %861, %v108
    %v863 = vpop.permute.xlu0 %862
    %865 = vset.pattern.permute.xlu0 1
    %866 = vperm.xlu0 %865, %v109
    %v867 = vpop.permute.xlu0 %866
    %869 = vset.pattern.permute.xlu0 1
    %870 = vperm.xlu0 %869, %v110
    %v871 = vpop.permute.xlu0 %870
    %873 = vset.pattern.permute.xlu0 1
    %874 = vperm.xlu0 %873, %v111
    %v875 = vpop.permute.xlu0 %874
    %877 = vset.pattern.permute.xlu0 1
    %878 = vperm.xlu0 %877, %v112
    %v879 = vpop.permute.xlu0 %878
    %881 = vset.pattern.permute.xlu0 1
    %882 = vperm.xlu0 %881, %v113
    %v883 = vpop.permute.xlu0 %882
    %885 = vset.pattern.permute.xlu0 1
    %886 = vperm.xlu0 %885, %v114
    %v887 = vpop.permute.xlu0 %886
    %889 = vset.pattern.permute.xlu0 1
    %890 = vperm.xlu0 %889, %v115
    %v891 = vpop.permute.xlu0 %890
    %893 = vset.pattern.permute.xlu0 1
    %894 = vperm.xlu0 %893, %v116
    %v895 = vpop.permute.xlu0 %894
    %897 = vset.pattern.permute.xlu0 1
    %898 = vperm.xlu0 %897, %v117
    %v899 = vpop.permute.xlu0 %898
    %v933 = vunpack.c.l.b16 %v709
    %v934 = vunpack.c.h.b16 %v709
    %v935 = vunpack.c.l.b16 %v710
    %v936 = vunpack.c.h.b16 %v710
    %v937 = vunpack.c.l.b16 %v711
    %v938 = vunpack.c.h.b16 %v711
    %v939 = vunpack.c.l.b16 %v712
    %v940 = vunpack.c.h.b16 %v712
    %v941 = vunpack.c.l.b16 %v713
    %v942 = vunpack.c.h.b16 %v713
    %v943 = vunpack.c.l.b16 %v714
    %v944 = vunpack.c.h.b16 %v714
    %v945 = vunpack.c.l.b16 %v715
    %v946 = vunpack.c.h.b16 %v715
    %v947 = vunpack.c.l.b16 %v716
    %v948 = vunpack.c.h.b16 %v716
    %v949 = vunpack.c.l.b16 %v717
    %v950 = vunpack.c.h.b16 %v717
    %v951 = vunpack.c.l.b16 %v718
    %v952 = vunpack.c.h.b16 %v718
    %v953 = vunpack.c.l.b16 %v719
    %v954 = vunpack.c.h.b16 %v719
    %v955 = vunpack.c.l.b16 %v720
    %v956 = vunpack.c.h.b16 %v720
    %v957 = vunpack.c.l.b16 %v721
    %v958 = vunpack.c.h.b16 %v721
    %v959 = vunpack.c.l.b16 %v722
    %v960 = vunpack.c.h.b16 %v722
    %v961 = vunpack.c.l.b16 %v723
    %v962 = vunpack.c.h.b16 %v723
    %v963 = vunpack.c.l.b16 %v724
    %v964 = vunpack.c.h.b16 %v724
    %v965 = vunpack.c.l.b16 %v725
    %v966 = vunpack.c.h.b16 %v725
    %v967 = vunpack.c.l.b16 %v726
    %v968 = vunpack.c.h.b16 %v726
    %v969 = vunpack.c.l.b16 %v727
    %v970 = vunpack.c.h.b16 %v727
    %v971 = vunpack.c.l.b16 %v728
    %v972 = vunpack.c.h.b16 %v728
    %v973 = vunpack.c.l.b16 %v729
    %v974 = vunpack.c.h.b16 %v729
    %v975 = vunpack.c.l.b16 %v730
    %v976 = vunpack.c.h.b16 %v730
    %v977 = vunpack.c.l.b16 %v731
    %v978 = vunpack.c.h.b16 %v731
    %v979 = vunpack.c.l.b16 %v732
    %v980 = vunpack.c.h.b16 %v732
    %v981 = vunpack.c.l.b16 %v733
    %v982 = vunpack.c.h.b16 %v733
    %v983 = vunpack.c.l.b16 %v734
    %v984 = vunpack.c.h.b16 %v734
    %v985 = vunpack.c.l.b16 %v735
    %v986 = vunpack.c.h.b16 %v735
    %v987 = vunpack.c.l.b16 %v736
    %v988 = vunpack.c.h.b16 %v736
    %v989 = vunpack.c.l.b16 %v737
    %v990 = vunpack.c.h.b16 %v737
    %v991 = vunpack.c.l.b16 %v738
    %v992 = vunpack.c.h.b16 %v738
    %v993 = vunpack.c.l.b16 %v739
    %v994 = vunpack.c.h.b16 %v739
    %v995 = vunpack.c.l.b16 %v740
    %v996 = vunpack.c.h.b16 %v740
    %v997 = vpack.c.b16 %v935, %v933
    %v998 = vpack.c.b16 %v936, %v934
    %v999 = vpack.c.b16 %v939, %v937
    %v1000 = vpack.c.b16 %v940, %v938
    %v1001 = vpack.c.b16 %v943, %v941
    %v1002 = vpack.c.b16 %v944, %v942
    %v1003 = vpack.c.b16 %v947, %v945
    %v1004 = vpack.c.b16 %v948, %v946
    %v1005 = vpack.c.b16 %v951, %v949
    %v1006 = vpack.c.b16 %v952, %v950
    %v1007 = vpack.c.b16 %v955, %v953
    %v1008 = vpack.c.b16 %v956, %v954
    %v1009 = vpack.c.b16 %v959, %v957
    %v1010 = vpack.c.b16 %v960, %v958
    %v1011 = vpack.c.b16 %v963, %v961
    %v1012 = vpack.c.b16 %v964, %v962
    %v1013 = vpack.c.b16 %v967, %v965
    %v1014 = vpack.c.b16 %v968, %v966
    %v1015 = vpack.c.b16 %v971, %v969
    %v1016 = vpack.c.b16 %v972, %v970
    %v1017 = vpack.c.b16 %v975, %v973
    %v1018 = vpack.c.b16 %v976, %v974
    %v1019 = vpack.c.b16 %v979, %v977
    %v1020 = vpack.c.b16 %v980, %v978
    %v1021 = vpack.c.b16 %v983, %v981
    %v1022 = vpack.c.b16 %v984, %v982
    %v1023 = vpack.c.b16 %v987, %v985
    %v1024 = vpack.c.b16 %v988, %v986
    %v1025 = vpack.c.b16 %v991, %v989
    %v1026 = vpack.c.b16 %v992, %v990
    %v1027 = vpack.c.b16 %v995, %v993
    %v1028 = vpack.c.b16 %v996, %v994
    %1061 = vmatprep.subr.bf16.mxu0 %v742
    %1062 = vmatpush1.bf16.msra.mxu0 %v741
    %1063 = vmatprep.subr.bf16.mxu0 %v744
    %1064 = vmatpush1.bf16.msra.mxu0 %v743
    %1065 = vmatprep.subr.bf16.mxu0 %v746
    %1066 = vmatpush1.bf16.msra.mxu0 %v745
    %1067 = vmatprep.subr.bf16.mxu0 %v748
    %1068 = vmatpush1.bf16.msra.mxu0 %v747
    %1069 = vmatprep.subr.bf16.mxu0 %v750
    %1070 = vmatpush1.bf16.msra.mxu0 %v749
    %1071 = vmatprep.subr.bf16.mxu0 %v752
    %1072 = vmatpush1.bf16.msra.mxu0 %v751
    %1073 = vmatprep.subr.bf16.mxu0 %v754
    %1074 = vmatpush1.bf16.msra.mxu0 %v753
    %1075 = vmatprep.subr.bf16.mxu0 %v756
    %1076 = vmatpush1.bf16.msra.mxu0 %v755
    %1077 = vmatprep.subr.bf16.mxu0 %v758
    %1078 = vmatpush1.bf16.msra.mxu0 %v757
    %1079 = vmatprep.subr.bf16.mxu0 %v760
    %1080 = vmatpush1.bf16.msra.mxu0 %v759
    %1081 = vmatprep.subr.bf16.mxu0 %v762
    %1082 = vmatpush1.bf16.msra.mxu0 %v761
    %1083 = vmatprep.subr.bf16.mxu0 %v764
    %1084 = vmatpush1.bf16.msra.mxu0 %v763
    %1085 = vmatprep.subr.bf16.mxu0 %v766
    %1086 = vmatpush1.bf16.msra.mxu0 %v765
    %1087 = vmatprep.subr.bf16.mxu0 %v768
    %1088 = vmatpush1.bf16.msra.mxu0 %v767
    %1089 = vmatprep.subr.bf16.mxu0 %v770
    %1090 = vmatpush1.bf16.msra.mxu0 %v769
    %1091 = vmatprep.subr.bf16.mxu0 %v772
    %1092 = vmatpush1.bf16.msra.mxu0 %v771
    %1093 = vmatprep.mubr.bf16.mxu0 %v998
    %1094 = vmatmul.mubr.bf16.gmra.mrb[0].mxu0 %v997
    %v1095 = vpop.f32.mrb[0].mxu0
    %v1096 = vadd.f32 %v775, %v1095
    %v1097 = vpop.f32.mrb[0].mxu0
    %v1098 = vadd.f32 %v775, %v1097
    %v1099 = vpop.f32.mrb[0].mxu0
    %v1100 = vadd.f32 %v779, %v1099
    %v1101 = vpop.f32.mrb[0].mxu0
    %v1102 = vadd.f32 %v779, %v1101
    %1103 = vmatprep.mubr.bf16.mxu0 %v1000
    %1104 = vmatmul.mubr.bf16.gmra.mrb[0].mxu0 %v999
    %v1105 = vpop.f32.mrb[0].mxu0
    %v1106 = vadd.f32 %v783, %v1105
    %v1107 = vpop.f32.mrb[0].mxu0
    %v1108 = vadd.f32 %v783, %v1107
    %v1109 = vpop.f32.mrb[0].mxu0
    %v1110 = vadd.f32 %v787, %v1109
    %v1111 = vpop.f32.mrb[0].mxu0
    %v1112 = vadd.f32 %v787, %v1111
    %1113 = vmatprep.mubr.bf16.mxu0 %v1002
    %1114 = vmatmul.mubr.bf16.gmra.mrb[0].mxu0 %v1001
    %v1115 = vpop.f32.mrb[0].mxu0
    %v1116 = vadd.f32 %v791, %v1115
    %v1117 = vpop.f32.mrb[0].mxu0
    %v1118 = vadd.f32 %v791, %v1117
    %v1119 = vpop.f32.mrb[0].mxu0
    %v1120 = vadd.f32 %v795, %v1119
    %v1121 = vpop.f32.mrb[0].mxu0
    %v1122 = vadd.f32 %v795, %v1121
    %1123 = vmatprep.mubr.bf16.mxu0 %v1004
    %1124 = vmatmul.mubr.bf16.gmra.mrb[0].mxu0 %v1003
    %v1125 = vpop.f32.mrb[0].mxu0
    %v1126 = vadd.f32 %v799, %v1125
    %v1127 = vpop.f32.mrb[0].mxu0
    %v1128 = vadd.f32 %v799, %v1127
    %v1129 = vpop.f32.mrb[0].mxu0
    %v1130 = vadd.f32 %v803, %v1129
    %v1131 = vpop.f32.mrb[0].mxu0
    %v1132 = vadd.f32 %v803, %v1131
    %1133 = vmatprep.mubr.bf16.mxu0 %v1006
    %1134 = vmatmul.mubr.bf16.gmra.mrb[0].mxu0 %v1005
    %v1135 = vpop.f32.mrb[0].mxu0
    %v1136 = vadd.f32 %v807, %v1135
    %v1137 = vpop.f32.mrb[0].mxu0
    %v1138 = vadd.f32 %v807, %v1137
    %v1139 = vpop.f32.mrb[0].mxu0
    %v1140 = vadd.f32 %v811, %v1139
    %v1141 = vpop.f32.mrb[0].mxu0
    %v1142 = vadd.f32 %v811, %v1141
    %1143 = vmatprep.mubr.bf16.mxu0 %v1008
    %1144 = vmatmul.mubr.bf16.gmra.mrb[0].mxu0 %v1007
    %v1145 = vpop.f32.mrb[0].mxu0
    %v1146 = vadd.f32 %v815, %v1145
    %v1147 = vpop.f32.mrb[0].mxu0
    %v1148 = vadd.f32 %v815, %v1147
    %v1149 = vpop.f32.mrb[0].mxu0
    %v1150 = vadd.f32 %v819, %v1149
    %v1151 = vpop.f32.mrb[0].mxu0
    %v1152 = vadd.f32 %v819, %v1151
    %1153 = vmatprep.mubr.bf16.mxu0 %v1010
    %1154 = vmatmul.mubr.bf16.gmra.mrb[0].mxu0 %v1009
    %v1155 = vpop.f32.mrb[0].mxu0
    %v1156 = vadd.f32 %v823, %v1155
    %v1157 = vpop.f32.mrb[0].mxu0
    %v1158 = vadd.f32 %v823, %v1157
    %v1159 = vpop.f32.mrb[0].mxu0
    %v1160 = vadd.f32 %v827, %v1159
    %v1161 = vpop.f32.mrb[0].mxu0
    %v1162 = vadd.f32 %v827, %v1161
    %1163 = vmatprep.mubr.bf16.mxu0 %v1012
    %1164 = vmatmul.mubr.bf16.gmra.mrb[0].mxu0 %v1011
    %v1165 = vpop.f32.mrb[0].mxu0
    %v1166 = vadd.f32 %v831, %v1165
    %v1167 = vpop.f32.mrb[0].mxu0
    %v1168 = vadd.f32 %v831, %v1167
    %v1169 = vpop.f32.mrb[0].mxu0
    %v1170 = vadd.f32 %v835, %v1169
    %v1171 = vpop.f32.mrb[0].mxu0
    %v1172 = vadd.f32 %v835, %v1171
    %1173 = vmatprep.mubr.bf16.mxu0 %v1014
    %1174 = vmatmul.mubr.bf16.gmra.mrb[0].mxu0 %v1013
    %v1175 = vpop.f32.mrb[0].mxu0
    %v1176 = vadd.f32 %v839, %v1175
    %v1177 = vpop.f32.mrb[0].mxu0
    %v1178 = vadd.f32 %v839, %v1177
    %v1179 = vpop.f32.mrb[0].mxu0
    %v1180 = vadd.f32 %v843, %v1179
    %v1181 = vpop.f32.mrb[0].mxu0
    %v1182 = vadd.f32 %v843, %v1181
    %1183 = vmatprep.mubr.bf16.mxu0 %v1016
    %1184 = vmatmul.mubr.bf16.gmra.mrb[0].mxu0 %v1015
    %v1185 = vpop.f32.mrb[0].mxu0
    %v1186 = vadd.f32 %v847, %v1185
    %v1187 = vpop.f32.mrb[0].mxu0
    %v1188 = vadd.f32 %v847, %v1187
    %v1189 = vpop.f32.mrb[0].mxu0
    %v1190 = vadd.f32 %v851, %v1189
    %v1191 = vpop.f32.mrb[0].mxu0
    %v1192 = vadd.f32 %v851, %v1191
    %1193 = vmatprep.mubr.bf16.mxu0 %v1018
    %1194 = vmatmul.mubr.bf16.gmra.mrb[0].mxu0 %v1017
    %v1195 = vpop.f32.mrb[0].mxu0
    %v1196 = vadd.f32 %v855, %v1195
    %v1197 = vpop.f32.mrb[0].mxu0
    %v1198 = vadd.f32 %v855, %v1197
    %v1199 = vpop.f32.mrb[0].mxu0
    %v1200 = vadd.f32 %v859, %v1199
    %v1201 = vpop.f32.mrb[0].mxu0
    %v1202 = vadd.f32 %v859, %v1201
    %1203 = vmatprep.mubr.bf16.mxu0 %v1020
    %1204 = vmatmul.mubr.bf16.gmra.mrb[0].mxu0 %v1019
    %v1205 = vpop.f32.mrb[0].mxu0
    %v1206 = vadd.f32 %v863, %v1205
    %v1207 = vpop.f32.mrb[0].mxu0
    %v1208 = vadd.f32 %v863, %v1207
    %v1209 = vpop.f32.mrb[0].mxu0
    %v1210 = vadd.f32 %v867, %v1209
    %v1211 = vpop.f32.mrb[0].mxu0
    %v1212 = vadd.f32 %v867, %v1211
    %1213 = vmatprep.mubr.bf16.mxu0 %v1022
    %1214 = vmatmul.mubr.bf16.gmra.mrb[0].mxu0 %v1021
    %v1215 = vpop.f32.mrb[0].mxu0
    %v1216 = vadd.f32 %v871, %v1215
    %v1217 = vpop.f32.mrb[0].mxu0
    %v1218 = vadd.f32 %v871, %v1217
    %v1219 = vpop.f32.mrb[0].mxu0
    %v1220 = vadd.f32 %v875, %v1219
    %v1221 = vpop.f32.mrb[0].mxu0
    %v1222 = vadd.f32 %v875, %v1221
    %1223 = vmatprep.mubr.bf16.mxu0 %v1024
    %1224 = vmatmul.mubr.bf16.gmra.mrb[0].mxu0 %v1023
    %v1225 = vpop.f32.mrb[0].mxu0
    %v1226 = vadd.f32 %v879, %v1225
    %v1227 = vpop.f32.mrb[0].mxu0
    %v1228 = vadd.f32 %v879, %v1227
    %v1229 = vpop.f32.mrb[0].mxu0
    %v1230 = vadd.f32 %v883, %v1229
    %v1231 = vpop.f32.mrb[0].mxu0
    %v1232 = vadd.f32 %v883, %v1231
    %1233 = vmatprep.mubr.bf16.mxu0 %v1026
    %1234 = vmatmul.mubr.bf16.gmra.mrb[0].mxu0 %v1025
    %v1235 = vpop.f32.mrb[0].mxu0
    %v1236 = vadd.f32 %v887, %v1235
    %v1237 = vpop.f32.mrb[0].mxu0
    %v1238 = vadd.f32 %v887, %v1237
    %v1239 = vpop.f32.mrb[0].mxu0
    %v1240 = vadd.f32 %v891, %v1239
    %v1241 = vpop.f32.mrb[0].mxu0
    %v1242 = vadd.f32 %v891, %v1241
    %1243 = vmatprep.mubr.bf16.mxu0 %v1028
    %1244 = vmatmul.mubr.bf16.gmra.mrb[0].mxu0 %v1027
    %v1245 = vpop.f32.mrb[0].mxu0
    %v1246 = vadd.f32 %v895, %v1245
    %v1247 = vpop.f32.mrb[0].mxu0
    %v1248 = vadd.f32 %v895, %v1247
    %v1249 = vpop.f32.mrb[0].mxu0
    %v1250 = vadd.f32 %v899, %v1249
    %v1251 = vpop.f32.mrb[0].mxu0
    %v1252 = vadd.f32 %v899, %v1251
    %1253 = vdwg.mxu0
    %v1254 = vmax.f32 %v1096, 0.0
    %v1255 = vmax.f32 %v1098, 0.0
    %v1256 = vmax.f32 %v1100, 0.0
    %v1257 = vmax.f32 %v1102, 0.0
    %v1258 = vmax.f32 %v1106, 0.0
    %v1259 = vmax.f32 %v1108, 0.0
    %v1260 = vmax.f32 %v1110, 0.0
    %v1261 = vmax.f32 %v1112, 0.0
    %v1262 = vmax.f32 %v1116, 0.0
    %v1263 = vmax.f32 %v1118, 0.0
    %v1264 = vmax.f32 %v1120, 0.0
    %v1265 = vmax.f32 %v1122, 0.0
    %v1266 = vmax.f32 %v1126, 0.0
    %v1267 = vmax.f32 %v1128, 0.0
    %v1268 = vmax.f32 %v1130, 0.0
    %v1269 = vmax.f32 %v1132, 0.0
    %v1270 = vmax.f32 %v1136, 0.0
    %v1271 = vmax.f32 %v1138, 0.0
    %v1272 = vmax.f32 %v1140, 0.0
    %v1273 = vmax.f32 %v1142, 0.0
    %v1274 = vmax.f32 %v1146, 0.0
    %v1275 = vmax.f32 %v1148, 0.0
    %v1276 = vmax.f32 %v1150, 0.0
    %v1277 = vmax.f32 %v1152, 0.0
    %v1278 = vmax.f32 %v1156, 0.0
    %v1279 = vmax.f32 %v1158, 0.0
    %v1280 = vmax.f32 %v1160, 0.0
    %v1281 = vmax.f32 %v1162, 0.0
    %v1282 = vmax.f32 %v1166, 0.0
    %v1283 = vmax.f32 %v1168, 0.0
    %v1284 = vmax.f32 %v1170, 0.0
    %v1285 = vmax.f32 %v1172, 0.0
    %v1286 = vmax.f32 %v1176, 0.0
    %v1287 = vmax.f32 %v1178, 0.0
    %v1288 = vmax.f32 %v1180, 0.0
    %v1289 = vmax.f32 %v1182, 0.0
    %v1290 = vmax.f32 %v1186, 0.0
    %v1291 = vmax.f32 %v1188, 0.0
    %v1292 = vmax.f32 %v1190, 0.0
    %v1293 = vmax.f32 %v1192, 0.0
    %v1294 = vmax.f32 %v1196, 0.0
    %v1295 = vmax.f32 %v1198, 0.0
    %v1296 = vmax.f32 %v1200, 0.0
    %v1297 = vmax.f32 %v1202, 0.0
    %v1298 = vmax.f32 %v1206, 0.0
    %v1299 = vmax.f32 %v1208, 0.0
    %v1300 = vmax.f32 %v1210, 0.0
    %v1301 = vmax.f32 %v1212, 0.0
    %v1302 = vmax.f32 %v1216, 0.0
    %v1303 = vmax.f32 %v1218, 0.0
    %v1304 = vmax.f32 %v1220, 0.0
    %v1305 = vmax.f32 %v1222, 0.0
    %v1306 = vmax.f32 %v1226, 0.0
    %v1307 = vmax.f32 %v1228, 0.0
    %v1308 = vmax.f32 %v1230, 0.0
    %v1309 = vmax.f32 %v1232, 0.0
    %v1310 = vmax.f32 %v1236, 0.0
    %v1311 = vmax.f32 %v1238, 0.0
    %v1312 = vmax.f32 %v1240, 0.0
    %v1313 = vmax.f32 %v1242, 0.0
    %v1314 = vmax.f32 %v1246, 0.0
    %v1315 = vmax.f32 %v1248, 0.0
    %v1316 = vmax.f32 %v1250, 0.0
    %v1317 = vmax.f32 %v1252, 0.0
    %s1318 = scalar_lea.vmem [#allocation7], 256
    %v1319 = vld [vmem:[%s1318] sm:$0xff]
    %v1320 = vld [vmem:[%s1318 + $0x8] sm:$0xff]
    %v1321 = vld [vmem:[%s1318 + $0x10] sm:$0xff]
    %v1322 = vld [vmem:[%s1318 + $0x18] sm:$0xff]
    %v1323 = vld [vmem:[%s1318 + $0x20] sm:$0xff]
    %v1324 = vld [vmem:[%s1318 + $0x28] sm:$0xff]
    %v1325 = vld [vmem:[%s1318 + $0x30] sm:$0xff]
    %v1326 = vld [vmem:[%s1318 + $0x38] sm:$0xff]
    %v1327 = vld [vmem:[%s1318 + $0x40] sm:$0xff]
    %v1328 = vld [vmem:[%s1318 + $0x48] sm:$0xff]
    %v1329 = vld [vmem:[%s1318 + $0x50] sm:$0xff]
    %v1330 = vld [vmem:[%s1318 + $0x58] sm:$0xff]
    %v1331 = vld [vmem:[%s1318 + $0x60] sm:$0xff]
    %v1332 = vld [vmem:[%s1318 + $0x68] sm:$0xff]
    %v1333 = vld [vmem:[%s1318 + $0x70] sm:$0xff]
    %v1334 = vld [vmem:[%s1318 + $0x78] sm:$0xff]
    %v1335 = vld [vmem:[%s1318 + $0x80] sm:$0xff]
    %v1336 = vld [vmem:[%s1318 + $0x88] sm:$0xff]
    %v1337 = vld [vmem:[%s1318 + $0x90] sm:$0xff]
    %v1338 = vld [vmem:[%s1318 + $0x98] sm:$0xff]
    %v1339 = vld [vmem:[%s1318 + $0xa0] sm:$0xff]
    %v1340 = vld [vmem:[%s1318 + $0xa8] sm:$0xff]
    %v1341 = vld [vmem:[%s1318 + $0xb0] sm:$0xff]
    %v1342 = vld [vmem:[%s1318 + $0xb8] sm:$0xff]
    %v1343 = vld [vmem:[%s1318 + $0xc0] sm:$0xff]
    %v1344 = vld [vmem:[%s1318 + $0xc8] sm:$0xff]
    %v1345 = vld [vmem:[%s1318 + $0xd0] sm:$0xff]
    %v1346 = vld [vmem:[%s1318 + $0xd8] sm:$0xff]
    %v1347 = vld [vmem:[%s1318 + $0xe0] sm:$0xff]
    %v1348 = vld [vmem:[%s1318 + $0xe8] sm:$0xff]
    %v1349 = vld [vmem:[%s1318 + $0xf0] sm:$0xff]
    %v1350 = vld [vmem:[%s1318 + $0xf8] sm:$0xff]
    %v1351 = vpack.c.bf16 %v1256, %v1254
    %v1352 = vpack.c.bf16 %v1257, %v1255
    %v1353 = vpack.c.bf16 %v1260, %v1258
    %v1354 = vpack.c.bf16 %v1261, %v1259
    %v1355 = vpack.c.bf16 %v1264, %v1262
    %v1356 = vpack.c.bf16 %v1265, %v1263
    %v1357 = vpack.c.bf16 %v1268, %v1266
    %v1358 = vpack.c.bf16 %v1269, %v1267
    %v1359 = vpack.c.bf16 %v1272, %v1270
    %v1360 = vpack.c.bf16 %v1273, %v1271
    %v1361 = vpack.c.bf16 %v1276, %v1274
    %v1362 = vpack.c.bf16 %v1277, %v1275
    %v1363 = vpack.c.bf16 %v1280, %v1278
    %v1364 = vpack.c.bf16 %v1281, %v1279
    %v1365 = vpack.c.bf16 %v1284, %v1282
    %v1366 = vpack.c.bf16 %v1285, %v1283
    %v1367 = vpack.c.bf16 %v1288, %v1286
    %v1368 = vpack.c.bf16 %v1289, %v1287
    %v1369 = vpack.c.bf16 %v1292, %v1290
    %v1370 = vpack.c.bf16 %v1293, %v1291
    %v1371 = vpack.c.bf16 %v1296, %v1294
    %v1372 = vpack.c.bf16 %v1297, %v1295
    %v1373 = vpack.c.bf16 %v1300, %v1298
    %v1374 = vpack.c.bf16 %v1301, %v1299
    %v1375 = vpack.c.bf16 %v1304, %v1302
    %v1376 = vpack.c.bf16 %v1305, %v1303
    %v1377 = vpack.c.bf16 %v1308, %v1306
    %v1378 = vpack.c.bf16 %v1309, %v1307
    %v1379 = vpack.c.bf16 %v1312, %v1310
    %v1380 = vpack.c.bf16 %v1313, %v1311
    %v1381 = vpack.c.bf16 %v1316, %v1314
    %v1382 = vpack.c.bf16 %v1317, %v1315
    %1383 = vset.pattern.permute.xlu0 2
    %1384 = vperm.xlu0 %1383, %v86
    %v1385 = vpop.permute.xlu0 %1384
    %1387 = vset.pattern.permute.xlu0 2
    %1388 = vperm.xlu0 %1387, %v87
    %v1389 = vpop.permute.xlu0 %1388
    %1391 = vset.pattern.permute.xlu0 2
    %1392 = vperm.xlu0 %1391, %v88
    %v1393 = vpop.permute.xlu0 %1392
    %1395 = vset.pattern.permute.xlu0 2
    %1396 = vperm.xlu0 %1395, %v89
    %v1397 = vpop.permute.xlu0 %1396
    %1399 = vset.pattern.permute.xlu0 2
    %1400 = vperm.xlu0 %1399, %v90
    %v1401 = vpop.permute.xlu0 %1400
    %1403 = vset.pattern.permute.xlu0 2
    %1404 = vperm.xlu0 %1403, %v91
    %v1405 = vpop.permute.xlu0 %1404
    %1407 = vset.pattern.permute.xlu0 2
    %1408 = vperm.xlu0 %1407, %v92
    %v1409 = vpop.permute.xlu0 %1408
    %1411 = vset.pattern.permute.xlu0 2
    %1412 = vperm.xlu0 %1411, %v93
    %v1413 = vpop.permute.xlu0 %1412
    %1415 = vset.pattern.permute.xlu0 2
    %1416 = vperm.xlu0 %1415, %v94
    %v1417 = vpop.permute.xlu0 %1416
    %1419 = vset.pattern.permute.xlu0 2
    %1420 = vperm.xlu0 %1419, %v95
    %v1421 = vpop.permute.xlu0 %1420
    %1423 = vset.pattern.permute.xlu0 2
    %1424 = vperm.xlu0 %1423, %v96
    %v1425 = vpop.permute.xlu0 %1424
    %1427 = vset.pattern.permute.xlu0 2
    %1428 = vperm.xlu0 %1427, %v97
    %v1429 = vpop.permute.xlu0 %1428
    %1431 = vset.pattern.permute.xlu0 2
    %1432 = vperm.xlu0 %1431, %v98
    %v1433 = vpop.permute.xlu0 %1432
    %1435 = vset.pattern.permute.xlu0 2
    %1436 = vperm.xlu0 %1435, %v99
    %v1437 = vpop.permute.xlu0 %1436
    %1439 = vset.pattern.permute.xlu0 2
    %1440 = vperm.xlu0 %1439, %v100
    %v1441 = vpop.permute.xlu0 %1440
    %1443 = vset.pattern.permute.xlu0 2
    %1444 = vperm.xlu0 %1443, %v101
    %v1445 = vpop.permute.xlu0 %1444
    %1447 = vset.pattern.permute.xlu0 2
    %1448 = vperm.xlu0 %1447, %v102
    %v1449 = vpop.permute.xlu0 %1448
    %1451 = vset.pattern.permute.xlu0 2
    %1452 = vperm.xlu0 %1451, %v103
    %v1453 = vpop.permute.xlu0 %1452
    %1455 = vset.pattern.permute.xlu0 2
    %1456 = vperm.xlu0 %1455, %v104
    %v1457 = vpop.permute.xlu0 %1456
    %1459 = vset.pattern.permute.xlu0 2
    %1460 = vperm.xlu0 %1459, %v105
    %v1461 = vpop.permute.xlu0 %1460
    %1463 = vset.pattern.permute.xlu0 2
    %1464 = vperm.xlu0 %1463, %v106
    %v1465 = vpop.permute.xlu0 %1464
    %1467 = vset.pattern.permute.xlu0 2
    %1468 = vperm.xlu0 %1467, %v107
    %v1469 = vpop.permute.xlu0 %1468
    %1471 = vset.pattern.permute.xlu0 2
    %1472 = vperm.xlu0 %1471, %v108
    %v1473 = vpop.permute.xlu0 %1472
    %1475 = vset.pattern.permute.xlu0 2
    %1476 = vperm.xlu0 %1475, %v109
    %v1477 = vpop.permute.xlu0 %1476
    %1479 = vset.pattern.permute.xlu0 2
    %1480 = vperm.xlu0 %1479, %v110
    %v1481 = vpop.permute.xlu0 %1480
    %1483 = vset.pattern.permute.xlu0 2
    %1484 = vperm.xlu0 %1483, %v111
    %v1485 = vpop.permute.xlu0 %1484
    %1487 = vset.pattern.permute.xlu0 2
    %1488 = vperm.xlu0 %1487, %v112
    %v1489 = vpop.permute.xlu0 %1488
    %1491 = vset.pattern.permute.xlu0 2
    %1492 = vperm.xlu0 %1491, %v113
    %v1493 = vpop.permute.xlu0 %1492
    %1495 = vset.pattern.permute.xlu0 2
    %1496 = vperm.xlu0 %1495, %v114
    %v1497 = vpop.permute.xlu0 %1496
    %1499 = vset.pattern.permute.xlu0 2
    %1500 = vperm.xlu0 %1499, %v115
    %v1501 = vpop.permute.xlu0 %1500
    %1503 = vset.pattern.permute.xlu0 2
    %1504 = vperm.xlu0 %1503, %v116
    %v1505 = vpop.permute.xlu0 %1504
    %1507 = vset.pattern.permute.xlu0 2
    %1508 = vperm.xlu0 %1507, %v117
    %v1509 = vpop.permute.xlu0 %1508
    %v1543 = vunpack.c.l.b16 %v1319
    %v1544 = vunpack.c.h.b16 %v1319
    %v1545 = vunpack.c.l.b16 %v1320
    %v1546 = vunpack.c.h.b16 %v1320
    %v1547 = vunpack.c.l.b16 %v1321
    %v1548 = vunpack.c.h.b16 %v1321
    %v1549 = vunpack.c.l.b16 %v1322
    %v1550 = vunpack.c.h.b16 %v1322
    %v1551 = vunpack.c.l.b16 %v1323
    %v1552 = vunpack.c.h.b16 %v1323
    %v1553 = vunpack.c.l.b16 %v1324
    %v1554 = vunpack.c.h.b16 %v1324
    %v1555 = vunpack.c.l.b16 %v1325
    %v1556 = vunpack.c.h.b16 %v1325
    %v1557 = vunpack.c.l.b16 %v1326
    %v1558 = vunpack.c.h.b16 %v1326
    %v1559 = vunpack.c.l.b16 %v1327
    %v1560 = vunpack.c.h.b16 %v1327
    %v1561 = vunpack.c.l.b16 %v1328
    %v1562 = vunpack.c.h.b16 %v1328
    %v1563 = vunpack.c.l.b16 %v1329
    %v1564 = vunpack.c.h.b16 %v1329
    %v1565 = vunpack.c.l.b16 %v1330
    %v1566 = vunpack.c.h.b16 %v1330
    %v1567 = vunpack.c.l.b16 %v1331
    %v1568 = vunpack.c.h.b16 %v1331
    %v1569 = vunpack.c.l.b16 %v1332
    %v1570 = vunpack.c.h.b16 %v1332
    %v1571 = vunpack.c.l.b16 %v1333
    %v1572 = vunpack.c.h.b16 %v1333
    %v1573 = vunpack.c.l.b16 %v1334
    %v1574 = vunpack.c.h.b16 %v1334
    %v1575 = vunpack.c.l.b16 %v1335
    %v1576 = vunpack.c.h.b16 %v1335
    %v1577 = vunpack.c.l.b16 %v1336
    %v1578 = vunpack.c.h.b16 %v1336
    %v1579 = vunpack.c.l.b16 %v1337
    %v1580 = vunpack.c.h.b16 %v1337
    %v1581 = vunpack.c.l.b16 %v1338
    %v1582 = vunpack.c.h.b16 %v1338
    %v1583 = vunpack.c.l.b16 %v1339
    %v1584 = vunpack.c.h.b16 %v1339
    %v1585 = vunpack.c.l.b16 %v1340
    %v1586 = vunpack.c.h.b16 %v1340
    %v1587 = vunpack.c.l.b16 %v1341
    %v1588 = vunpack.c.h.b16 %v1341
    %v1589 = vunpack.c.l.b16 %v1342
    %v1590 = vunpack.c.h.b16 %v1342
    %v1591 = vunpack.c.l.b16 %v1343
    %v1592 = vunpack.c.h.b16 %v1343
    %v1593 = vunpack.c.l.b16 %v1344
    %v1594 = vunpack.c.h.b16 %v1344
    %v1595 = vunpack.c.l.b16 %v1345
    %v1596 = vunpack.c.h.b16 %v1345
    %v1597 = vunpack.c.l.b16 %v1346
    %v1598 = vunpack.c.h.b16 %v1346
    %v1599 = vunpack.c.l.b16 %v1347
    %v1600 = vunpack.c.h.b16 %v1347
    %v1601 = vunpack.c.l.b16 %v1348
    %v1602 = vunpack.c.h.b16 %v1348
    %v1603 = vunpack.c.l.b16 %v1349
    %v1604 = vunpack.c.h.b16 %v1349
    %v1605 = vunpack.c.l.b16 %v1350
    %v1606 = vunpack.c.h.b16 %v1350
    %v1607 = vpack.c.b16 %v1545, %v1543
    %v1608 = vpack.c.b16 %v1546, %v1544
    %v1609 = vpack.c.b16 %v1549, %v1547
    %v1610 = vpack.c.b16 %v1550, %v1548
    %v1611 = vpack.c.b16 %v1553, %v1551
    %v1612 = vpack.c.b16 %v1554, %v1552
    %v1613 = vpack.c.b16 %v1557, %v1555
    %v1614 = vpack.c.b16 %v1558, %v1556
    %v1615 = vpack.c.b16 %v1561, %v1559
    %v1616 = vpack.c.b16 %v1562, %v1560
    %v1617 = vpack.c.b16 %v1565, %v1563
    %v1618 = vpack.c.b16 %v1566, %v1564
    %v1619 = vpack.c.b16 %v1569, %v1567
    %v1620 = vpack.c.b16 %v1570, %v1568
    %v1621 = vpack.c.b16 %v1573, %v1571
    %v1622 = vpack.c.b16 %v1574, %v1572
    %v1623 = vpack.c.b16 %v1577, %v1575
    %v1624 = vpack.c.b16 %v1578, %v1576
    %v1625 = vpack.c.b16 %v1581, %v1579
    %v1626 = vpack.c.b16 %v1582, %v1580
    %v1627 = vpack.c.b16 %v1585, %v1583
    %v1628 = vpack.c.b16 %v1586, %v1584
    %v1629 = vpack.c.b16 %v1589, %v1587
    %v1630 = vpack.c.b16 %v1590, %v1588
    %v1631 = vpack.c.b16 %v1593, %v1591
    %v1632 = vpack.c.b16 %v1594, %v1592
    %v1633 = vpack.c.b16 %v1597, %v1595
    %v1634 = vpack.c.b16 %v1598, %v1596
    %v1635 = vpack.c.b16 %v1601, %v1599
    %v1636 = vpack.c.b16 %v1602, %v1600
    %v1637 = vpack.c.b16 %v1605, %v1603
    %v1638 = vpack.c.b16 %v1606, %v1604
    %1671 = vmatprep.subr.bf16.mxu0 %v1352
    %1672 = vmatpush1.bf16.msra.mxu0 %v1351
    %1673 = vmatprep.subr.bf16.mxu0 %v1354
    %1674 = vmatpush1.bf16.msra.mxu0 %v1353
    %1675 = vmatprep.subr.bf16.mxu0 %v1356
    %1676 = vmatpush1.bf16.msra.mxu0 %v1355
    %1677 = vmatprep.subr.bf16.mxu0 %v1358
    %1678 = vmatpush1.bf16.msra.mxu0 %v1357
    %1679 = vmatprep.subr.bf16.mxu0 %v1360
    %1680 = vmatpush1.bf16.msra.mxu0 %v1359
    %1681 = vmatprep.subr.bf16.mxu0 %v1362
    %1682 = vmatpush1.bf16.msra.mxu0 %v1361
    %1683 = vmatprep.subr.bf16.mxu0 %v1364
    %1684 = vmatpush1.bf16.msra.mxu0 %v1363
    %1685 = vmatprep.subr.bf16.mxu0 %v1366
    %1686 = vmatpush1.bf16.msra.mxu0 %v1365
    %1687 = vmatprep.subr.bf16.mxu0 %v1368
    %1688 = vmatpush1.bf16.msra.mxu0 %v1367
    %1689 = vmatprep.subr.bf16.mxu0 %v1370
    %1690 = vmatpush1.bf16.msra.mxu0 %v1369
    %1691 = vmatprep.subr.bf16.mxu0 %v1372
    %1692 = vmatpush1.bf16.msra.mxu0 %v1371
    %1693 = vmatprep.subr.bf16.mxu0 %v1374
    %1694 = vmatpush1.bf16.msra.mxu0 %v1373
    %1695 = vmatprep.subr.bf16.mxu0 %v1376
    %1696 = vmatpush1.bf16.msra.mxu0 %v1375
    %1697 = vmatprep.subr.bf16.mxu0 %v1378
    %1698 = vmatpush1.bf16.msra.mxu0 %v1377
    %1699 = vmatprep.subr.bf16.mxu0 %v1380
    %1700 = vmatpush1.bf16.msra.mxu0 %v1379
    %1701 = vmatprep.subr.bf16.mxu0 %v1382
    %1702 = vmatpush1.bf16.msra.mxu0 %v1381
    %1703 = vmatprep.mubr.bf16.mxu0 %v1608
    %1704 = vmatmul.mubr.bf16.gmra.mrb[0].mxu0 %v1607
    %v1705 = vpop.f32.mrb[0].mxu0
    %v1706 = vadd.f32 %v1385, %v1705
    %v1707 = vpop.f32.mrb[0].mxu0
    %v1708 = vadd.f32 %v1385, %v1707
    %v1709 = vpop.f32.mrb[0].mxu0
    %v1710 = vadd.f32 %v1389, %v1709
    %v1711 = vpop.f32.mrb[0].mxu0
    %v1712 = vadd.f32 %v1389, %v1711
    %1713 = vmatprep.mubr.bf16.mxu0 %v1610
    %1714 = vmatmul.mubr.bf16.gmra.mrb[0].mxu0 %v1609
    %v1715 = vpop.f32.mrb[0].mxu0
    %v1716 = vadd.f32 %v1393, %v1715
    %v1717 = vpop.f32.mrb[0].mxu0
    %v1718 = vadd.f32 %v1393, %v1717
    %v1719 = vpop.f32.mrb[0].mxu0
    %v1720 = vadd.f32 %v1397, %v1719
    %v1721 = vpop.f32.mrb[0].mxu0
    %v1722 = vadd.f32 %v1397, %v1721
    %1723 = vmatprep.mubr.bf16.mxu0 %v1612
    %1724 = vmatmul.mubr.bf16.gmra.mrb[0].mxu0 %v1611
    %v1725 = vpop.f32.mrb[0].mxu0
    %v1726 = vadd.f32 %v1401, %v1725
    %v1727 = vpop.f32.mrb[0].mxu0
    %v1728 = vadd.f32 %v1401, %v1727
    %v1729 = vpop.f32.mrb[0].mxu0
    %v1730 = vadd.f32 %v1405, %v1729
    %v1731 = vpop.f32.mrb[0].mxu0
    %v1732 = vadd.f32 %v1405, %v1731
    %1733 = vmatprep.mubr.bf16.mxu0 %v1614
    %1734 = vmatmul.mubr.bf16.gmra.mrb[0].mxu0 %v1613
    %v1735 = vpop.f32.mrb[0].mxu0
    %v1736 = vadd.f32 %v1409, %v1735
    %v1737 = vpop.f32.mrb[0].mxu0
    %v1738 = vadd.f32 %v1409, %v1737
    %v1739 = vpop.f32.mrb[0].mxu0
    %v1740 = vadd.f32 %v1413, %v1739
    %v1741 = vpop.f32.mrb[0].mxu0
    %v1742 = vadd.f32 %v1413, %v1741
    %1743 = vmatprep.mubr.bf16.mxu0 %v1616
    %1744 = vmatmul.mubr.bf16.gmra.mrb[0].mxu0 %v1615
    %v1745 = vpop.f32.mrb[0].mxu0
    %v1746 = vadd.f32 %v1417, %v1745
    %v1747 = vpop.f32.mrb[0].mxu0
    %v1748 = vadd.f32 %v1417, %v1747
    %v1749 = vpop.f32.mrb[0].mxu0
    %v1750 = vadd.f32 %v1421, %v1749
    %v1751 = vpop.f32.mrb[0].mxu0
    %v1752 = vadd.f32 %v1421, %v1751
    %1753 = vmatprep.mubr.bf16.mxu0 %v1618
    %1754 = vmatmul.mubr.bf16.gmra.mrb[0].mxu0 %v1617
    %v1755 = vpop.f32.mrb[0].mxu0
    %v1756 = vadd.f32 %v1425, %v1755
    %v1757 = vpop.f32.mrb[0].mxu0
    %v1758 = vadd.f32 %v1425, %v1757
    %v1759 = vpop.f32.mrb[0].mxu0
    %v1760 = vadd.f32 %v1429, %v1759
    %v1761 = vpop.f32.mrb[0].mxu0
    %v1762 = vadd.f32 %v1429, %v1761
    %1763 = vmatprep.mubr.bf16.mxu0 %v1620
    %1764 = vmatmul.mubr.bf16.gmra.mrb[0].mxu0 %v1619
    %v1765 = vpop.f32.mrb[0].mxu0
    %v1766 = vadd.f32 %v1433, %v1765
    %v1767 = vpop.f32.mrb[0].mxu0
    %v1768 = vadd.f32 %v1433, %v1767
    %v1769 = vpop.f32.mrb[0].mxu0
    %v1770 = vadd.f32 %v1437, %v1769
    %v1771 = vpop.f32.mrb[0].mxu0
    %v1772 = vadd.f32 %v1437, %v1771
    %1773 = vmatprep.mubr.bf16.mxu0 %v1622
    %1774 = vmatmul.mubr.bf16.gmra.mrb[0].mxu0 %v1621
    %v1775 = vpop.f32.mrb[0].mxu0
    %v1776 = vadd.f32 %v1441, %v1775
    %v1777 = vpop.f32.mrb[0].mxu0
    %v1778 = vadd.f32 %v1441, %v1777
    %v1779 = vpop.f32.mrb[0].mxu0
    %v1780 = vadd.f32 %v1445, %v1779
    %v1781 = vpop.f32.mrb[0].mxu0
    %v1782 = vadd.f32 %v1445, %v1781
    %1783 = vmatprep.mubr.bf16.mxu0 %v1624
    %1784 = vmatmul.mubr.bf16.gmra.mrb[0].mxu0 %v1623
    %v1785 = vpop.f32.mrb[0].mxu0
    %v1786 = vadd.f32 %v1449, %v1785
    %v1787 = vpop.f32.mrb[0].mxu0
    %v1788 = vadd.f32 %v1449, %v1787
    %v1789 = vpop.f32.mrb[0].mxu0
    %v1790 = vadd.f32 %v1453, %v1789
    %v1791 = vpop.f32.mrb[0].mxu0
    %v1792 = vadd.f32 %v1453, %v1791
    %1793 = vmatprep.mubr.bf16.mxu0 %v1626
    %1794 = vmatmul.mubr.bf16.gmra.mrb[0].mxu0 %v1625
    %v1795 = vpop.f32.mrb[0].mxu0
    %v1796 = vadd.f32 %v1457, %v1795
    %v1797 = vpop.f32.mrb[0].mxu0
    %v1798 = vadd.f32 %v1457, %v1797
    %v1799 = vpop.f32.mrb[0].mxu0
    %v1800 = vadd.f32 %v1461, %v1799
    %v1801 = vpop.f32.mrb[0].mxu0
    %v1802 = vadd.f32 %v1461, %v1801
    %1803 = vmatprep.mubr.bf16.mxu0 %v1628
    %1804 = vmatmul.mubr.bf16.gmra.mrb[0].mxu0 %v1627
    %v1805 = vpop.f32.mrb[0].mxu0
    %v1806 = vadd.f32 %v1465, %v1805
    %v1807 = vpop.f32.mrb[0].mxu0
    %v1808 = vadd.f32 %v1465, %v1807
    %v1809 = vpop.f32.mrb[0].mxu0
    %v1810 = vadd.f32 %v1469, %v1809
    %v1811 = vpop.f32.mrb[0].mxu0
    %v1812 = vadd.f32 %v1469, %v1811
    %1813 = vmatprep.mubr.bf16.mxu0 %v1630
    %1814 = vmatmul.mubr.bf16.gmra.mrb[0].mxu0 %v1629
    %v1815 = vpop.f32.mrb[0].mxu0
    %v1816 = vadd.f32 %v1473, %v1815
    %v1817 = vpop.f32.mrb[0].mxu0
    %v1818 = vadd.f32 %v1473, %v1817
    %v1819 = vpop.f32.mrb[0].mxu0
    %v1820 = vadd.f32 %v1477, %v1819
    %v1821 = vpop.f32.mrb[0].mxu0
    %v1822 = vadd.f32 %v1477, %v1821
    %1823 = vmatprep.mubr.bf16.mxu0 %v1632
    %1824 = vmatmul.mubr.bf16.gmra.mrb[0].mxu0 %v1631
    %v1825 = vpop.f32.mrb[0].mxu0
    %v1826 = vadd.f32 %v1481, %v1825
    %v1827 = vpop.f32.mrb[0].mxu0
    %v1828 = vadd.f32 %v1481, %v1827
    %v1829 = vpop.f32.mrb[0].mxu0
    %v1830 = vadd.f32 %v1485, %v1829
    %v1831 = vpop.f32.mrb[0].mxu0
    %v1832 = vadd.f32 %v1485, %v1831
    %1833 = vmatprep.mubr.bf16.mxu0 %v1634
    %1834 = vmatmul.mubr.bf16.gmra.mrb[0].mxu0 %v1633
    %v1835 = vpop.f32.mrb[0].mxu0
    %v1836 = vadd.f32 %v1489, %v1835
    %v1837 = vpop.f32.mrb[0].mxu0
    %v1838 = vadd.f32 %v1489, %v1837
    %v1839 = vpop.f32.mrb[0].mxu0
    %v1840 = vadd.f32 %v1493, %v1839
    %v1841 = vpop.f32.mrb[0].mxu0
    %v1842 = vadd.f32 %v1493, %v1841
    %1843 = vmatprep.mubr.bf16.mxu0 %v1636
    %1844 = vmatmul.mubr.bf16.gmra.mrb[0].mxu0 %v1635
    %v1845 = vpop.f32.mrb[0].mxu0
    %v1846 = vadd.f32 %v1497, %v1845
    %v1847 = vpop.f32.mrb[0].mxu0
    %v1848 = vadd.f32 %v1497, %v1847
    %v1849 = vpop.f32.mrb[0].mxu0
    %v1850 = vadd.f32 %v1501, %v1849
    %v1851 = vpop.f32.mrb[0].mxu0
    %v1852 = vadd.f32 %v1501, %v1851
    %1853 = vmatprep.mubr.bf16.mxu0 %v1638
    %1854 = vmatmul.mubr.bf16.gmra.mrb[0].mxu0 %v1637
    %v1855 = vpop.f32.mrb[0].mxu0
    %v1856 = vadd.f32 %v1505, %v1855
    %v1857 = vpop.f32.mrb[0].mxu0
    %v1858 = vadd.f32 %v1505, %v1857
    %v1859 = vpop.f32.mrb[0].mxu0
    %v1860 = vadd.f32 %v1509, %v1859
    %v1861 = vpop.f32.mrb[0].mxu0
    %v1862 = vadd.f32 %v1509, %v1861
    %1863 = vdwg.mxu0
    %v1864 = vmax.f32 %v1706, 0.0
    %v1865 = vmax.f32 %v1708, 0.0
    %v1866 = vmax.f32 %v1710, 0.0
    %v1867 = vmax.f32 %v1712, 0.0
    %v1868 = vmax.f32 %v1716, 0.0
    %v1869 = vmax.f32 %v1718, 0.0
    %v1870 = vmax.f32 %v1720, 0.0
    %v1871 = vmax.f32 %v1722, 0.0
    %v1872 = vmax.f32 %v1726, 0.0
    %v1873 = vmax.f32 %v1728, 0.0
    %v1874 = vmax.f32 %v1730, 0.0
    %v1875 = vmax.f32 %v1732, 0.0
    %v1876 = vmax.f32 %v1736, 0.0
    %v1877 = vmax.f32 %v1738, 0.0
    %v1878 = vmax.f32 %v1740, 0.0
    %v1879 = vmax.f32 %v1742, 0.0
    %v1880 = vmax.f32 %v1746, 0.0
    %v1881 = vmax.f32 %v1748, 0.0
    %v1882 = vmax.f32 %v1750, 0.0
    %v1883 = vmax.f32 %v1752, 0.0
    %v1884 = vmax.f32 %v1756, 0.0
    %v1885 = vmax.f32 %v1758, 0.0
    %v1886 = vmax.f32 %v1760, 0.0
    %v1887 = vmax.f32 %v1762, 0.0
    %v1888 = vmax.f32 %v1766, 0.0
    %v1889 = vmax.f32 %v1768, 0.0
    %v1890 = vmax.f32 %v1770, 0.0
    %v1891 = vmax.f32 %v1772, 0.0
    %v1892 = vmax.f32 %v1776, 0.0
    %v1893 = vmax.f32 %v1778, 0.0
    %v1894 = vmax.f32 %v1780, 0.0
    %v1895 = vmax.f32 %v1782, 0.0
    %v1896 = vmax.f32 %v1786, 0.0
    %v1897 = vmax.f32 %v1788, 0.0
    %v1898 = vmax.f32 %v1790, 0.0
    %v1899 = vmax.f32 %v1792, 0.0
    %v1900 = vmax.f32 %v1796, 0.0
    %v1901 = vmax.f32 %v1798, 0.0
    %v1902 = vmax.f32 %v1800, 0.0
    %v1903 = vmax.f32 %v1802, 0.0
    %v1904 = vmax.f32 %v1806, 0.0
    %v1905 = vmax.f32 %v1808, 0.0
    %v1906 = vmax.f32 %v1810, 0.0
    %v1907 = vmax.f32 %v1812, 0.0
    %v1908 = vmax.f32 %v1816, 0.0
    %v1909 = vmax.f32 %v1818, 0.0
    %v1910 = vmax.f32 %v1820, 0.0
    %v1911 = vmax.f32 %v1822, 0.0
    %v1912 = vmax.f32 %v1826, 0.0
    %v1913 = vmax.f32 %v1828, 0.0
    %v1914 = vmax.f32 %v1830, 0.0
    %v1915 = vmax.f32 %v1832, 0.0
    %v1916 = vmax.f32 %v1836, 0.0
    %v1917 = vmax.f32 %v1838, 0.0
    %v1918 = vmax.f32 %v1840, 0.0
    %v1919 = vmax.f32 %v1842, 0.0
    %v1920 = vmax.f32 %v1846, 0.0
    %v1921 = vmax.f32 %v1848, 0.0
    %v1922 = vmax.f32 %v1850, 0.0
    %v1923 = vmax.f32 %v1852, 0.0
    %v1924 = vmax.f32 %v1856, 0.0
    %v1925 = vmax.f32 %v1858, 0.0
    %v1926 = vmax.f32 %v1860, 0.0
    %v1927 = vmax.f32 %v1862, 0.0
    %v1928 = vld [vmem:[#allocation8] sm:$0xff]
    %v1929 = vpack.c.bf16 %v1866, %v1864
    %v1930 = vpack.c.bf16 %v1867, %v1865
    %v1931 = vpack.c.bf16 %v1870, %v1868
    %v1932 = vpack.c.bf16 %v1871, %v1869
    %v1933 = vpack.c.bf16 %v1874, %v1872
    %v1934 = vpack.c.bf16 %v1875, %v1873
    %v1935 = vpack.c.bf16 %v1878, %v1876
    %v1936 = vpack.c.bf16 %v1879, %v1877
    %v1937 = vpack.c.bf16 %v1882, %v1880
    %v1938 = vpack.c.bf16 %v1883, %v1881
    %v1939 = vpack.c.bf16 %v1886, %v1884
    %v1940 = vpack.c.bf16 %v1887, %v1885
    %v1941 = vpack.c.bf16 %v1890, %v1888
    %v1942 = vpack.c.bf16 %v1891, %v1889
    %v1943 = vpack.c.bf16 %v1894, %v1892
    %v1944 = vpack.c.bf16 %v1895, %v1893
    %v1945 = vpack.c.bf16 %v1898, %v1896
    %v1946 = vpack.c.bf16 %v1899, %v1897
    %v1947 = vpack.c.bf16 %v1902, %v1900
    %v1948 = vpack.c.bf16 %v1903, %v1901
    %v1949 = vpack.c.bf16 %v1906, %v1904
    %v1950 = vpack.c.bf16 %v1907, %v1905
    %v1951 = vpack.c.bf16 %v1910, %v1908
    %v1952 = vpack.c.bf16 %v1911, %v1909
    %v1953 = vpack.c.bf16 %v1914, %v1912
    %v1954 = vpack.c.bf16 %v1915, %v1913
    %v1955 = vpack.c.bf16 %v1918, %v1916
    %v1956 = vpack.c.bf16 %v1919, %v1917
    %v1957 = vpack.c.bf16 %v1922, %v1920
    %v1958 = vpack.c.bf16 %v1923, %v1921
    %v1959 = vpack.c.bf16 %v1926, %v1924
    %v1960 = vpack.c.bf16 %v1927, %v1925
    %1961 = vset.pattern.permute.xlu0 3
    %1962 = vperm.xlu0 %1961, %v86
    %v1963 = vpop.permute.xlu0 %1962
    %v1966 = vunpack.c.l.b16 %v1928
    %v1967 = vunpack.c.h.b16 %v1928
    %v1968 = vpack.c.b16 %v1966, %v1966
    %v1969 = vpack.c.b16 %v1967, %v1967
    %1972 = vmatprep.subr.bf16.mxu0 %v1930
    %1973 = vmatpush1.bf16.msra.mxu0 %v1929
    %1974 = vmatprep.subr.bf16.mxu0 %v1932
    %1975 = vmatpush1.bf16.msra.mxu0 %v1931
    %1976 = vmatprep.subr.bf16.mxu0 %v1934
    %1977 = vmatpush1.bf16.msra.mxu0 %v1933
    %1978 = vmatprep.subr.bf16.mxu0 %v1936
    %1979 = vmatpush1.bf16.msra.mxu0 %v1935
    %1980 = vmatprep.subr.bf16.mxu0 %v1938
    %1981 = vmatpush1.bf16.msra.mxu0 %v1937
    %1982 = vmatprep.subr.bf16.mxu0 %v1940
    %1983 = vmatpush1.bf16.msra.mxu0 %v1939
    %1984 = vmatprep.subr.bf16.mxu0 %v1942
    %1985 = vmatpush1.bf16.msra.mxu0 %v1941
    %1986 = vmatprep.subr.bf16.mxu0 %v1944
    %1987 = vmatpush1.bf16.msra.mxu0 %v1943
    %1988 = vmatprep.subr.bf16.mxu0 %v1946
    %1989 = vmatpush1.bf16.msra.mxu0 %v1945
    %1990 = vmatprep.subr.bf16.mxu0 %v1948
    %1991 = vmatpush1.bf16.msra.mxu0 %v1947
    %1992 = vmatprep.subr.bf16.mxu0 %v1950
    %1993 = vmatpush1.bf16.msra.mxu0 %v1949
    %1994 = vmatprep.subr.bf16.mxu0 %v1952
    %1995 = vmatpush1.bf16.msra.mxu0 %v1951
    %1996 = vmatprep.subr.bf16.mxu0 %v1954
    %1997 = vmatpush1.bf16.msra.mxu0 %v1953
    %1998 = vmatprep.subr.bf16.mxu0 %v1956
    %1999 = vmatpush1.bf16.msra.mxu0 %v1955
    %2000 = vmatprep.subr.bf16.mxu0 %v1958
    %2001 = vmatpush1.bf16.msra.mxu0 %v1957
    %2002 = vmatprep.subr.bf16.mxu0 %v1960
    %2003 = vmatpush1.bf16.msra.mxu0 %v1959
    %2004 = vmatprep.mubr.bf16.mxu0 %v1969
    %2005 = vmatmul.mubr.bf16.gmra.mrb[0].mxu0 %v1968
    %v2006 = vpop.f32.mrb[0].mxu0
    %v2007 = vadd.f32 %v1963, %v2006
    %v2008 = vpop.f32.mrb[0].mxu0
    %v2009 = vadd.f32 %v1963, %v2008
    %v2010 = vpop.f32.mrb[0].mxu0
    %v2011 = vpop.f32.mrb[0].mxu0
    %2012 = vdwg.mxu0
    %2013 = vst [vmem:[#allocation11] sm:$0xff] %v2007
    %2014 = vst [vmem:[#allocation11 + $0x8] sm:$0xff] %v2009
    // Predicated region
    $region42: #{tpu_custom_call.1} parent=1 // pred_check
      _
    $region43: #{tpu_custom_call.1} parent=1 // pred_check_branch
      %2016 = sbr.rel (0) target = $region45
    $region44: #{tpu_custom_call.1} parent=1 // pred_region
      %s2018 = ssub.s32 256, 256
      %2019 = vsyncadd [#allocation4], %s2018
      %s2021 = sshll.u32 [#allocation11], 4
      %s2022 = int_to_ptr.vmem [resolvable:$true] %s2021
      %2024 = dma.vmem_to_hbm [thread:$0]  %s2022, 256, %s5, [#allocation4]
    $region45: #{tpu_custom_call.1} parent=1 // pred_fallthru
      _
    // Predicated region
    $region46: #{tpu_custom_call.1} parent=1 // pred_check
      _
    $region47: #{tpu_custom_call.1} parent=1 // pred_check_branch
      %2026 = sbr.rel (0) target = $region49
    $region48: #{tpu_custom_call.1} parent=1 // pred_region
      %2027 = dma.done [#allocation4], 256
    $region49: #{tpu_custom_call.1} parent=1 // pred_fallthru
      _
    %2028 = vsyncpa [#allocation3], 1
    %2029 = vsyncpa [#allocation6], 1
    %2030 = vsyncpa [#allocation9], 1
    %2031 = vsyncpa [#allocation4], 1

</llo_original>
